<compile_context>
chip_gen: v5e
topology: v5e:2x2
jax: 0.10.0
libtpu: 0.0.40
codegen_flags: <defaults>
</compile_context>

<pallas_src>
import numpy as np
import jax
import jax.numpy as jnp
from jax.experimental import pallas as pl
from jax.experimental.pallas import tpu as pltpu

EPS = 1e-5
KW = 6       # kernel width of both convs
C_HID = 32   # hidden channel count of both conv blocks


# ------------------------------ Pallas kernel --------------------------------
def _encoder_kernel(a_ref, x_ref, w1_ref, b1_ref, w2_ref, b2_ref, wf_ref, bf_ref,
                    o_ref, col1_ref, y1_ref, col2_ref, y2_ref, h_ref):
    B, chunk, Din = x_ref.shape
    C = w1_ref.shape[1]
    W1 = chunk - KW + 1            # conv1 output width (stride 1)
    W2f = W1 - KW + 1              # conv2 stride-1 positions (even ones kept below)
    W2 = (W1 - KW) // 2 + 1        # conv2 output width (stride 2)

    a1 = a_ref[0]                  # PReLU slopes from SMEM (scalar path)
    a2 = a_ref[1]

    # ---- conv1: im2col into VMEM scratch, then ONE stacked MXU matmul (M = B*W1) ----
    for b in range(B):
        for kw in range(KW):
            col1_ref[b * W1:(b + 1) * W1, kw * Din:(kw + 1) * Din] = \
                x_ref[b, kw:kw + W1, :]
    y1 = jnp.dot(col1_ref[...], w1_ref[...],
                 preferred_element_type=jnp.float32) + b1_ref[...]
    y1_ref[...] = jnp.where(y1 >= 0, y1, a1 * y1)        # PReLU1 (BN1 folded into w2/b2)

    # ---- conv2: im2col of all stride-1 positions, ONE stacked matmul (M = B*W2f) ----
    for b in range(B):
        for kw in range(KW):
            col2_ref[b * W2f:(b + 1) * W2f, kw * C:(kw + 1) * C] = \
                y1_ref[b * W1 + kw: b * W1 + kw + W2f, :]
    y2 = jnp.dot(col2_ref[...], w2_ref[...],
                 preferred_element_type=jnp.float32) + b2_ref[...]
    y2_ref[...] = jnp.where(y2 >= 0, y2, a2 * y2)        # PReLU2 (BN2 folded into fc)

    # ---- keep even (stride-2) positions, lane-dense (w, c) flatten, ONE fc matmul ----
    for b in range(B):
        for j in range(W2):
            h_ref[b:b + 1, j * C:(j + 1) * C] = \
                y2_ref[b * W2f + 2 * j: b * W2f + 2 * j + 1, :]
    o_ref[...] = jnp.dot(h_ref[...], wf_ref[...],
                         preferred_element_type=jnp.float32) + bf_ref[...]


# ------------------------------- wrapper --------------------------------------
def encoder_conv_forward(x, prep):
    B, depth, n_ch, chunk = x.shape
    Din = depth * n_ch
    C = C_HID
    W1 = chunk - KW + 1
    W2f = W1 - KW + 1
    W2 = (W1 - KW) // 2 + 1
    n_out = prep["wf"].shape[1]
    # Only per-call glue: NCHW -> channel-last (B, W, C_in*kH). Everything else happens
    # inside the single fused Pallas kernel.
    x_nwc = jnp.transpose(x, (0, 3, 1, 2)).reshape(B, chunk, Din)
    return pl.pallas_call(
        _encoder_kernel,
        out_shape=jax.ShapeDtypeStruct((B, n_out), jnp.float32),
        in_specs=[pl.BlockSpec(memory_space=pltpu.MemorySpace.SMEM)]
        + [pl.BlockSpec(memory_space=pltpu.MemorySpace.VMEM)] * 7,
        out_specs=pl.BlockSpec(memory_space=pltpu.MemorySpace.VMEM),
        scratch_shapes=[
            pltpu.VMEM((B * W1, KW * Din), jnp.float32),   # conv1 im2col
            pltpu.VMEM((B * W1, C), jnp.float32),          # post-PReLU1 activations
            pltpu.VMEM((B * W2f, KW * C), jnp.float32),    # conv2 im2col
            pltpu.VMEM((B * W2f, C), jnp.float32),         # post-PReLU2 activations
            pltpu.VMEM((B, W2 * C), jnp.float32),          # flattened fc input
        ],
    )(prep["a"], x_nwc, prep["w1"], prep["b1"], prep["w2"], prep["b2"],
      prep["wf"], prep["bf"])


# --------------------------- params & preprocessing ---------------------------
def init_params(key, args):
    depth, n_ch, chunk = args["input_dim"]
    latent = args["latent_dim"]
    mult = args["latent_multiplier"]
    L = int((chunk - 6 + 1 - 6 + 1) / 2)          # chunk_lenght_after_convs
    n_out = latent * mult
    ks = jax.random.split(key, 14)
    p = {}
    # block 1: Conv2d(depth, 32, (n_ch, 6)), PReLU(), BatchNorm2d(32)
    p["c1_w"] = 0.1 * jax.random.normal(ks[0], (C_HID, depth, n_ch, KW), jnp.float32)
    p["c1_b"] = 0.1 * jax.random.normal(ks[1], (C_HID,), jnp.float32)
    p["a1"] = jnp.float32(0.25)                   # PyTorch PReLU default init
    p["bn1_g"] = 1.0 + 0.1 * jax.random.normal(ks[2], (C_HID,), jnp.float32)
    p["bn1_b"] = 0.1 * jax.random.normal(ks[3], (C_HID,), jnp.float32)
    p["bn1_m"] = 0.1 * jax.random.normal(ks[4], (C_HID,), jnp.float32)
    p["bn1_v"] = jax.random.uniform(ks[5], (C_HID,), jnp.float32, 0.5, 1.5)
    # block 2: Conv2d(32, 32, (1, 6), stride=(1, 2)), PReLU(), BatchNorm2d(32)
    p["c2_w"] = 0.1 * jax.random.normal(ks[6], (C_HID, C_HID, 1, KW), jnp.float32)
    p["c2_b"] = 0.1 * jax.random.normal(ks[7], (C_HID,), jnp.float32)
    p["a2"] = jnp.float32(0.25)
    p["bn2_g"] = 1.0 + 0.1 * jax.random.normal(ks[8], (C_HID,), jnp.float32)
    p["bn2_b"] = 0.1 * jax.random.normal(ks[9], (C_HID,), jnp.float32)
    p["bn2_m"] = 0.1 * jax.random.normal(ks[10], (C_HID,), jnp.float32)
    p["bn2_v"] = jax.random.uniform(ks[11], (C_HID,), jnp.float32, 0.5, 1.5)
    # fc: Linear(32*L, latent_dim * latent_multiplier): weight (out, in), bias (out,)
    p["fc_w"] = 0.1 * jax.random.normal(ks[12], (n_out, C_HID * L), jnp.float32)
    p["fc_b"] = 0.1 * jax.random.normal(ks[13], (n_out,), jnp.float32)
    return p, (depth, n_ch, chunk, n_out, L)


def prepare_params(p, dims):
    """All weight re-layouts and BatchNorm folds, done ONCE (hoisted out of the forward)."""
    depth, n_ch, chunk, n_out, L = dims
    C = C_HID
    Din = depth * n_ch
    # BatchNorm (inference mode) -> scale/shift, then pushed into the next linear op.
    s1 = p["bn1_g"] / jnp.sqrt(p["bn1_v"] + EPS)
    t1 = p["bn1_b"] - p["bn1_m"] * s1
    s2 = p["bn2_g"] / jnp.sqrt(p["bn2_v"] + EPS)
    t2 = p["bn2_b"] - p["bn2_m"] * s2
    # conv1 (Cout, Cin, kH, kW) -> im2col weight (KW*Din, Cout); feature = kw*Din + ci*n_ch + kh
    w1 = p["c1_w"].transpose(3, 1, 2, 0).reshape(KW * Din, C)
    b1 = p["c1_b"].reshape(1, C)
    # conv2 (Cout, Cin, 1, kW): BN1 scale folded into the weights, BN1 shift into the bias
    w2raw = p["c2_w"][:, :, 0, :]                               # (Cout, Cin, KW)
    w2 = (w2raw * s1[None, :, None]).transpose(2, 1, 0).reshape(KW * C, C)
    b2 = (p["c2_b"] + jnp.einsum("i,oik->o", t1, w2raw)).reshape(1, C)
    # fc (n_out, C*L), torch flatten index = c*L + w; kernel flatten index = w*C + c; BN2 folded
    fc3 = p["fc_w"].reshape(n_out, C, L)
    wf = (fc3 * s2[None, :, None]).transpose(2, 1, 0).reshape(L * C, n_out)
    bf = (p["fc_b"] + jnp.einsum("c,ocw->o", t2, fc3)).reshape(1, n_out)
    a = jnp.stack([p["a1"], p["a2"]]).astype(jnp.float32)       # PReLU slopes -> SMEM
    return {"a": a, "w1": w1, "b1": b1, "w2": w2, "b2": b2, "wf": wf, "bf": bf}


# ------------------------------ numpy reference -------------------------------
def reference_forward(x, p, dims):
    depth, n_ch, chunk, n_out, L = dims
    x = np.asarray(x, np.float64)
    g = {k: np.asarray(v, np.float64) for k, v in p.items()}
    B = x.shape[0]

    def conv2d(v, w, b, stride):
        Bn, Ci, H, W = v.shape
        Co, _, kH, kWd = w.shape
        sH, sW = stride
        Ho = (H - kH) // sH + 1
        Wo = (W - kWd) // sW + 1
        out = np.zeros((Bn, Co, Ho, Wo), np.float64)
        for ho in range(Ho):
            for wo in range(Wo):
                patch = v[:, :, ho * sH:ho * sH + kH, wo * sW:wo * sW + kWd]
                out[:, :, ho, wo] = np.einsum("bchw,ochw->bo", patch, w)
        return out + b[None, :, None, None]

    def prelu(v, a):
        return np.where(v >= 0, v, a * v)

    def bn(v, gam, bet, m, var):
        return (v - m[None, :, None, None]) / np.sqrt(var[None, :, None, None] + EPS) * \
            gam[None, :, None, None] + bet[None, :, None, None]

    h = conv2d(x, g["c1_w"], g["c1_b"], (1, 1))
    h = prelu(h, float(g["a1"]))
    h = bn(h, g["bn1_g"], g["bn1_b"], g["bn1_m"], g["bn1_v"])
    h = conv2d(h, g["c2_w"], g["c2_b"], (1, 2))
    h = prelu(h, float(g["a2"]))
    h = bn(h, g["bn2_g"], g["bn2_b"], g["bn2_m"], g["bn2_v"])
    h = h.reshape(B, -1)
    return h @ g["fc_w"].T + g["fc_b"]


if __name__ == "__main__":
    args = {"input_dim": (2, 4, 32), "latent_dim": 16, "latent_multiplier": 2}
    B = 2
    key = jax.random.PRNGKey(0)
    k_params, k_x = jax.random.split(key)
    params, dims = init_params(k_params, args)
    depth, n_ch, chunk, n_out, L = dims
    x = jax.random.normal(k_x, (B, depth, n_ch, chunk), jnp.float32)

    prep = prepare_params(params, dims)          # hoisted: done once, not per forward call
    out = encoder_conv_forward(x, prep)
    out = jax.block_until_ready(out)
    assert out.shape == (B, n_out), out.shape

    ref = reference_forward(x, params, dims)
    np.testing.assert_allclose(np.asarray(out, np.float64), ref, rtol=2e-3, atol=2e-3)
    print("KERNEL_OK")
</pallas_src>

<mosaic_0001>
module attributes {stable_mosaic.version = 11 : i64} {
  func.func @_encoder_kernel(%arg0: memref<2xf32, #tpu.memory_space<smem>>, %arg1: memref<2x32x8xf32, #tpu.memory_space<vmem>>, %arg2: memref<48x32xf32, #tpu.memory_space<vmem>>, %arg3: memref<1x32xf32, #tpu.memory_space<vmem>>, %arg4: memref<192x32xf32, #tpu.memory_space<vmem>>, %arg5: memref<1x32xf32, #tpu.memory_space<vmem>>, %arg6: memref<352x32xf32, #tpu.memory_space<vmem>>, %arg7: memref<1x32xf32, #tpu.memory_space<vmem>>, %arg8: memref<2x32xf32, #tpu.memory_space<vmem>>, %arg9: memref<54x48xf32, #tpu.memory_space<vmem>>, %arg10: memref<54x32xf32, #tpu.memory_space<vmem>>, %arg11: memref<44x192xf32, #tpu.memory_space<vmem>>, %arg12: memref<44x32xf32, #tpu.memory_space<vmem>>, %arg13: memref<2x352xf32, #tpu.memory_space<vmem>>) attributes {dimension_semantics = [], scalar_prefetch = 0 : i64, scratch_operands = 5 : i64, tpu.core_type = #tpu.core_type<tc>} {
    %c0 = arith.constant 0 : index
    %0 = memref.load %arg0[%c0] : memref<2xf32, #tpu.memory_space<smem>>
    %c1 = arith.constant 1 : index
    %1 = memref.load %arg0[%c1] : memref<2xf32, #tpu.memory_space<smem>>
    %c0_0 = arith.constant 0 : index
    %c0_1 = arith.constant 0 : index
    %c0_2 = arith.constant 0 : index
    %2 = vector.load %arg1[%c0_0, %c0_1, %c0_2] : memref<2x32x8xf32, #tpu.memory_space<vmem>>, vector<1x27x8xf32>
    %3 = vector.shape_cast %2 : vector<1x27x8xf32> to vector<27x8xf32>
    %c0_3 = arith.constant 0 : index
    %c0_4 = arith.constant 0 : index
    %4 = vector.load %arg9[%c0_3, %c0_4] : memref<54x48xf32, #tpu.memory_space<vmem>>, vector<27x8xf32>
    tpu.vector_store %arg9[%c0_3, %c0_4], %3 {strides = array<i32>} : memref<54x48xf32, #tpu.memory_space<vmem>>, vector<27x8xf32>,
    %c0_5 = arith.constant 0 : index
    %c1_6 = arith.constant 1 : index
    %c0_7 = arith.constant 0 : index
    %5 = vector.load %arg1[%c0_5, %c1_6, %c0_7] : memref<2x32x8xf32, #tpu.memory_space<vmem>>, vector<1x27x8xf32>
    %6 = vector.shape_cast %5 : vector<1x27x8xf32> to vector<27x8xf32>
    %c0_8 = arith.constant 0 : index
    %c8 = arith.constant 8 : index
    %7 = vector.load %arg9[%c0_8, %c8] : memref<54x48xf32, #tpu.memory_space<vmem>>, vector<27x8xf32>
    tpu.vector_store %arg9[%c0_8, %c8], %6 {strides = array<i32>} : memref<54x48xf32, #tpu.memory_space<vmem>>, vector<27x8xf32>,
    %c0_9 = arith.constant 0 : index
    %c2 = arith.constant 2 : index
    %c0_10 = arith.constant 0 : index
    %8 = vector.load %arg1[%c0_9, %c2, %c0_10] : memref<2x32x8xf32, #tpu.memory_space<vmem>>, vector<1x27x8xf32>
    %9 = vector.shape_cast %8 : vector<1x27x8xf32> to vector<27x8xf32>
    %c0_11 = arith.constant 0 : index
    %c16 = arith.constant 16 : index
    %10 = vector.load %arg9[%c0_11, %c16] : memref<54x48xf32, #tpu.memory_space<vmem>>, vector<27x8xf32>
    tpu.vector_store %arg9[%c0_11, %c16], %9 {strides = array<i32>} : memref<54x48xf32, #tpu.memory_space<vmem>>, vector<27x8xf32>,
    %c0_12 = arith.constant 0 : index
    %c3 = arith.constant 3 : index
    %c0_13 = arith.constant 0 : index
    %11 = vector.load %arg1[%c0_12, %c3, %c0_13] : memref<2x32x8xf32, #tpu.memory_space<vmem>>, vector<1x27x8xf32>
    %12 = vector.shape_cast %11 : vector<1x27x8xf32> to vector<27x8xf32>
    %c0_14 = arith.constant 0 : index
    %c24 = arith.constant 24 : index
    %13 = vector.load %arg9[%c0_14, %c24] : memref<54x48xf32, #tpu.memory_space<vmem>>, vector<27x8xf32>
    tpu.vector_store %arg9[%c0_14, %c24], %12 {strides = array<i32>} : memref<54x48xf32, #tpu.memory_space<vmem>>, vector<27x8xf32>,
    %c0_15 = arith.constant 0 : index
    %c4 = arith.constant 4 : index
    %c0_16 = arith.constant 0 : index
    %14 = vector.load %arg1[%c0_15, %c4, %c0_16] : memref<2x32x8xf32, #tpu.memory_space<vmem>>, vector<1x27x8xf32>
    %15 = vector.shape_cast %14 : vector<1x27x8xf32> to vector<27x8xf32>
    %c0_17 = arith.constant 0 : index
    %c32 = arith.constant 32 : index
    %16 = vector.load %arg9[%c0_17, %c32] : memref<54x48xf32, #tpu.memory_space<vmem>>, vector<27x8xf32>
    tpu.vector_store %arg9[%c0_17, %c32], %15 {strides = array<i32>} : memref<54x48xf32, #tpu.memory_space<vmem>>, vector<27x8xf32>,
    %c0_18 = arith.constant 0 : index
    %c5 = arith.constant 5 : index
    %c0_19 = arith.constant 0 : index
    %17 = vector.load %arg1[%c0_18, %c5, %c0_19] : memref<2x32x8xf32, #tpu.memory_space<vmem>>, vector<1x27x8xf32>
    %18 = vector.shape_cast %17 : vector<1x27x8xf32> to vector<27x8xf32>
    %c0_20 = arith.constant 0 : index
    %c40 = arith.constant 40 : index
    %19 = vector.load %arg9[%c0_20, %c40] : memref<54x48xf32, #tpu.memory_space<vmem>>, vector<27x8xf32>
    tpu.vector_store %arg9[%c0_20, %c40], %18 {strides = array<i32>} : memref<54x48xf32, #tpu.memory_space<vmem>>, vector<27x8xf32>,
    %c1_21 = arith.constant 1 : index
    %c0_22 = arith.constant 0 : index
    %c0_23 = arith.constant 0 : index
    %20 = vector.load %arg1[%c1_21, %c0_22, %c0_23] : memref<2x32x8xf32, #tpu.memory_space<vmem>>, vector<1x27x8xf32>
    %21 = vector.shape_cast %20 : vector<1x27x8xf32> to vector<27x8xf32>
    %c27 = arith.constant 27 : index
    %c0_24 = arith.constant 0 : index
    %22 = vector.load %arg9[%c27, %c0_24] : memref<54x48xf32, #tpu.memory_space<vmem>>, vector<27x8xf32>
    tpu.vector_store %arg9[%c27, %c0_24], %21 {strides = array<i32>} : memref<54x48xf32, #tpu.memory_space<vmem>>, vector<27x8xf32>,
    %c1_25 = arith.constant 1 : index
    %c1_26 = arith.constant 1 : index
    %c0_27 = arith.constant 0 : index
    %23 = vector.load %arg1[%c1_25, %c1_26, %c0_27] : memref<2x32x8xf32, #tpu.memory_space<vmem>>, vector<1x27x8xf32>
    %24 = vector.shape_cast %23 : vector<1x27x8xf32> to vector<27x8xf32>
    %c27_28 = arith.constant 27 : index
    %c8_29 = arith.constant 8 : index
    %25 = vector.load %arg9[%c27_28, %c8_29] : memref<54x48xf32, #tpu.memory_space<vmem>>, vector<27x8xf32>
    tpu.vector_store %arg9[%c27_28, %c8_29], %24 {strides = array<i32>} : memref<54x48xf32, #tpu.memory_space<vmem>>, vector<27x8xf32>,
    %c1_30 = arith.constant 1 : index
    %c2_31 = arith.constant 2 : index
    %c0_32 = arith.constant 0 : index
    %26 = vector.load %arg1[%c1_30, %c2_31, %c0_32] : memref<2x32x8xf32, #tpu.memory_space<vmem>>, vector<1x27x8xf32>
    %27 = vector.shape_cast %26 : vector<1x27x8xf32> to vector<27x8xf32>
    %c27_33 = arith.constant 27 : index
    %c16_34 = arith.constant 16 : index
    %28 = vector.load %arg9[%c27_33, %c16_34] : memref<54x48xf32, #tpu.memory_space<vmem>>, vector<27x8xf32>
    tpu.vector_store %arg9[%c27_33, %c16_34], %27 {strides = array<i32>} : memref<54x48xf32, #tpu.memory_space<vmem>>, vector<27x8xf32>,
    %c1_35 = arith.constant 1 : index
    %c3_36 = arith.constant 3 : index
    %c0_37 = arith.constant 0 : index
    %29 = vector.load %arg1[%c1_35, %c3_36, %c0_37] : memref<2x32x8xf32, #tpu.memory_space<vmem>>, vector<1x27x8xf32>
    %30 = vector.shape_cast %29 : vector<1x27x8xf32> to vector<27x8xf32>
    %c27_38 = arith.constant 27 : index
    %c24_39 = arith.constant 24 : index
    %31 = vector.load %arg9[%c27_38, %c24_39] : memref<54x48xf32, #tpu.memory_space<vmem>>, vector<27x8xf32>
    tpu.vector_store %arg9[%c27_38, %c24_39], %30 {strides = array<i32>} : memref<54x48xf32, #tpu.memory_space<vmem>>, vector<27x8xf32>,
    %c1_40 = arith.constant 1 : index
    %c4_41 = arith.constant 4 : index
    %c0_42 = arith.constant 0 : index
    %32 = vector.load %arg1[%c1_40, %c4_41, %c0_42] : memref<2x32x8xf32, #tpu.memory_space<vmem>>, vector<1x27x8xf32>
    %33 = vector.shape_cast %32 : vector<1x27x8xf32> to vector<27x8xf32>
    %c27_43 = arith.constant 27 : index
    %c32_44 = arith.constant 32 : index
    %34 = vector.load %arg9[%c27_43, %c32_44] : memref<54x48xf32, #tpu.memory_space<vmem>>, vector<27x8xf32>
    tpu.vector_store %arg9[%c27_43, %c32_44], %33 {strides = array<i32>} : memref<54x48xf32, #tpu.memory_space<vmem>>, vector<27x8xf32>,
    %c1_45 = arith.constant 1 : index
    %c5_46 = arith.constant 5 : index
    %c0_47 = arith.constant 0 : index
    %35 = vector.load %arg1[%c1_45, %c5_46, %c0_47] : memref<2x32x8xf32, #tpu.memory_space<vmem>>, vector<1x27x8xf32>
    %36 = vector.shape_cast %35 : vector<1x27x8xf32> to vector<27x8xf32>
    %c27_48 = arith.constant 27 : index
    %c40_49 = arith.constant 40 : index
    %37 = vector.load %arg9[%c27_48, %c40_49] : memref<54x48xf32, #tpu.memory_space<vmem>>, vector<27x8xf32>
    tpu.vector_store %arg9[%c27_48, %c40_49], %36 {strides = array<i32>} : memref<54x48xf32, #tpu.memory_space<vmem>>, vector<27x8xf32>,
    %c0_50 = arith.constant 0 : index
    %c0_51 = arith.constant 0 : index
    %38 = vector.load %arg9[%c0_50, %c0_51] : memref<54x48xf32, #tpu.memory_space<vmem>>, vector<54x48xf32>
    %c0_52 = arith.constant 0 : index
    %c0_53 = arith.constant 0 : index
    %39 = vector.load %arg2[%c0_52, %c0_53] : memref<48x32xf32, #tpu.memory_space<vmem>>, vector<48x32xf32>
    %cst = arith.constant dense<0.000000e+00> : vector<54x32xf32>
    %40 = tpu.matmul %38, %39, %cst {dimension_numbers = #tpu.dot_dimension_numbers<[1], [0], [0], [1], [0, 0, 1, 1], [], []>} : vector<54x48xf32>, vector<48x32xf32>, vector<54x32xf32> -> vector<54x32xf32>
    %c0_54 = arith.constant 0 : index
    %c0_55 = arith.constant 0 : index
    %41 = vector.load %arg3[%c0_54, %c0_55] : memref<1x32xf32, #tpu.memory_space<vmem>>, vector<1x32xf32>
    %42 = vector.broadcast %41 : vector<1x32xf32> to vector<54x32xf32>
    %43 = arith.addf %40, %42 : vector<54x32xf32>
    %cst_56 = arith.constant 0.000000e+00 : f32
    %44 = vector.broadcast %cst_56 : f32 to vector<54x32xf32>
    %45 = arith.cmpf oge, %43, %44 : vector<54x32xf32>
    %46 = vector.broadcast %0 : f32 to vector<54x32xf32>
    %47 = arith.mulf %46, %43 : vector<54x32xf32>
    %48 = arith.select %45, %43, %47 : vector<54x32xi1>, vector<54x32xf32>
    %c0_57 = arith.constant 0 : index
    %c0_58 = arith.constant 0 : index
    %49 = vector.load %arg10[%c0_57, %c0_58] : memref<54x32xf32, #tpu.memory_space<vmem>>, vector<54x32xf32>
    tpu.vector_store %arg10[%c0_57, %c0_58], %48 {strides = array<i32>} : memref<54x32xf32, #tpu.memory_space<vmem>>, vector<54x32xf32>,
    %c0_59 = arith.constant 0 : index
    %c0_60 = arith.constant 0 : index
    %50 = vector.load %arg10[%c0_59, %c0_60] : memref<54x32xf32, #tpu.memory_space<vmem>>, vector<22x32xf32>
    %c0_61 = arith.constant 0 : index
    %c0_62 = arith.constant 0 : index
    %51 = vector.load %arg11[%c0_61, %c0_62] : memref<44x192xf32, #tpu.memory_space<vmem>>, vector<22x32xf32>
    tpu.vector_store %arg11[%c0_61, %c0_62], %50 {strides = array<i32>} : memref<44x192xf32, #tpu.memory_space<vmem>>, vector<22x32xf32>,
    %c1_63 = arith.constant 1 : index
    %c0_64 = arith.constant 0 : index
    %52 = vector.load %arg10[%c1_63, %c0_64] : memref<54x32xf32, #tpu.memory_space<vmem>>, vector<22x32xf32>
    %c0_65 = arith.constant 0 : index
    %c32_66 = arith.constant 32 : index
    %53 = vector.load %arg11[%c0_65, %c32_66] : memref<44x192xf32, #tpu.memory_space<vmem>>, vector<22x32xf32>
    tpu.vector_store %arg11[%c0_65, %c32_66], %52 {strides = array<i32>} : memref<44x192xf32, #tpu.memory_space<vmem>>, vector<22x32xf32>,
    %c2_67 = arith.constant 2 : index
    %c0_68 = arith.constant 0 : index
    %54 = vector.load %arg10[%c2_67, %c0_68] : memref<54x32xf32, #tpu.memory_space<vmem>>, vector<22x32xf32>
    %c0_69 = arith.constant 0 : index
    %c64 = arith.constant 64 : index
    %55 = vector.load %arg11[%c0_69, %c64] : memref<44x192xf32, #tpu.memory_space<vmem>>, vector<22x32xf32>
    tpu.vector_store %arg11[%c0_69, %c64], %54 {strides = array<i32>} : memref<44x192xf32, #tpu.memory_space<vmem>>, vector<22x32xf32>,
    %c3_70 = arith.constant 3 : index
    %c0_71 = arith.constant 0 : index
    %56 = vector.load %arg10[%c3_70, %c0_71] : memref<54x32xf32, #tpu.memory_space<vmem>>, vector<22x32xf32>
    %c0_72 = arith.constant 0 : index
    %c96 = arith.constant 96 : index
    %57 = vector.load %arg11[%c0_72, %c96] : memref<44x192xf32, #tpu.memory_space<vmem>>, vector<22x32xf32>
    tpu.vector_store %arg11[%c0_72, %c96], %56 {strides = array<i32>} : memref<44x192xf32, #tpu.memory_space<vmem>>, vector<22x32xf32>,
    %c4_73 = arith.constant 4 : index
    %c0_74 = arith.constant 0 : index
    %58 = vector.load %arg10[%c4_73, %c0_74] : memref<54x32xf32, #tpu.memory_space<vmem>>, vector<22x32xf32>
    %c0_75 = arith.constant 0 : index
    %c128 = arith.constant 128 : index
    %59 = vector.load %arg11[%c0_75, %c128] : memref<44x192xf32, #tpu.memory_space<vmem>>, vector<22x32xf32>
    tpu.vector_store %arg11[%c0_75, %c128], %58 {strides = array<i32>} : memref<44x192xf32, #tpu.memory_space<vmem>>, vector<22x32xf32>,
    %c5_76 = arith.constant 5 : index
    %c0_77 = arith.constant 0 : index
    %60 = vector.load %arg10[%c5_76, %c0_77] : memref<54x32xf32, #tpu.memory_space<vmem>>, vector<22x32xf32>
    %c0_78 = arith.constant 0 : index
    %c160 = arith.constant 160 : index
    %61 = vector.load %arg11[%c0_78, %c160] : memref<44x192xf32, #tpu.memory_space<vmem>>, vector<22x32xf32>
    tpu.vector_store %arg11[%c0_78, %c160], %60 {strides = array<i32>} : memref<44x192xf32, #tpu.memory_space<vmem>>, vector<22x32xf32>,
    %c27_79 = arith.constant 27 : index
    %c0_80 = arith.constant 0 : index
    %62 = vector.load %arg10[%c27_79, %c0_80] : memref<54x32xf32, #tpu.memory_space<vmem>>, vector<22x32xf32>
    %c22 = arith.constant 22 : index
    %c0_81 = arith.constant 0 : index
    %63 = vector.load %arg11[%c22, %c0_81] : memref<44x192xf32, #tpu.memory_space<vmem>>, vector<22x32xf32>
    tpu.vector_store %arg11[%c22, %c0_81], %62 {strides = array<i32>} : memref<44x192xf32, #tpu.memory_space<vmem>>, vector<22x32xf32>,
    %c28 = arith.constant 28 : index
    %c0_82 = arith.constant 0 : index
    %64 = vector.load %arg10[%c28, %c0_82] : memref<54x32xf32, #tpu.memory_space<vmem>>, vector<22x32xf32>
    %c22_83 = arith.constant 22 : index
    %c32_84 = arith.constant 32 : index
    %65 = vector.load %arg11[%c22_83, %c32_84] : memref<44x192xf32, #tpu.memory_space<vmem>>, vector<22x32xf32>
    tpu.vector_store %arg11[%c22_83, %c32_84], %64 {strides = array<i32>} : memref<44x192xf32, #tpu.memory_space<vmem>>, vector<22x32xf32>,
    %c29 = arith.constant 29 : index
    %c0_85 = arith.constant 0 : index
    %66 = vector.load %arg10[%c29, %c0_85] : memref<54x32xf32, #tpu.memory_space<vmem>>, vector<22x32xf32>
    %c22_86 = arith.constant 22 : index
    %c64_87 = arith.constant 64 : index
    %67 = vector.load %arg11[%c22_86, %c64_87] : memref<44x192xf32, #tpu.memory_space<vmem>>, vector<22x32xf32>
    tpu.vector_store %arg11[%c22_86, %c64_87], %66 {strides = array<i32>} : memref<44x192xf32, #tpu.memory_space<vmem>>, vector<22x32xf32>,
    %c30 = arith.constant 30 : index
    %c0_88 = arith.constant 0 : index
    %68 = vector.load %arg10[%c30, %c0_88] : memref<54x32xf32, #tpu.memory_space<vmem>>, vector<22x32xf32>
    %c22_89 = arith.constant 22 : index
    %c96_90 = arith.constant 96 : index
    %69 = vector.load %arg11[%c22_89, %c96_90] : memref<44x192xf32, #tpu.memory_space<vmem>>, vector<22x32xf32>
    tpu.vector_store %arg11[%c22_89, %c96_90], %68 {strides = array<i32>} : memref<44x192xf32, #tpu.memory_space<vmem>>, vector<22x32xf32>,
    %c31 = arith.constant 31 : index
    %c0_91 = arith.constant 0 : index
    %70 = vector.load %arg10[%c31, %c0_91] : memref<54x32xf32, #tpu.memory_space<vmem>>, vector<22x32xf32>
    %c22_92 = arith.constant 22 : index
    %c128_93 = arith.constant 128 : index
    %71 = vector.load %arg11[%c22_92, %c128_93] : memref<44x192xf32, #tpu.memory_space<vmem>>, vector<22x32xf32>
    tpu.vector_store %arg11[%c22_92, %c128_93], %70 {strides = array<i32>} : memref<44x192xf32, #tpu.memory_space<vmem>>, vector<22x32xf32>,
    %c32_94 = arith.constant 32 : index
    %c0_95 = arith.constant 0 : index
    %72 = vector.load %arg10[%c32_94, %c0_95] : memref<54x32xf32, #tpu.memory_space<vmem>>, vector<22x32xf32>
    %c22_96 = arith.constant 22 : index
    %c160_97 = arith.constant 160 : index
    %73 = vector.load %arg11[%c22_96, %c160_97] : memref<44x192xf32, #tpu.memory_space<vmem>>, vector<22x32xf32>
    tpu.vector_store %arg11[%c22_96, %c160_97], %72 {strides = array<i32>} : memref<44x192xf32, #tpu.memory_space<vmem>>, vector<22x32xf32>,
    %c0_98 = arith.constant 0 : index
    %c0_99 = arith.constant 0 : index
    %74 = vector.load %arg11[%c0_98, %c0_99] : memref<44x192xf32, #tpu.memory_space<vmem>>, vector<44x192xf32>
    %c0_100 = arith.constant 0 : index
    %c0_101 = arith.constant 0 : index
    %75 = vector.load %arg4[%c0_100, %c0_101] : memref<192x32xf32, #tpu.memory_space<vmem>>, vector<192x32xf32>
    %cst_102 = arith.constant dense<0.000000e+00> : vector<44x32xf32>
    %76 = tpu.matmul %74, %75, %cst_102 {dimension_numbers = #tpu.dot_dimension_numbers<[1], [0], [0], [1], [0, 0, 1, 1], [], []>} : vector<44x192xf32>, vector<192x32xf32>, vector<44x32xf32> -> vector<44x32xf32>
    %c0_103 = arith.constant 0 : index
    %c0_104 = arith.constant 0 : index
    %77 = vector.load %arg5[%c0_103, %c0_104] : memref<1x32xf32, #tpu.memory_space<vmem>>, vector<1x32xf32>
    %78 = vector.broadcast %77 : vector<1x32xf32> to vector<44x32xf32>
    %79 = arith.addf %76, %78 : vector<44x32xf32>
    %cst_105 = arith.constant 0.000000e+00 : f32
    %80 = vector.broadcast %cst_105 : f32 to vector<44x32xf32>
    %81 = arith.cmpf oge, %79, %80 : vector<44x32xf32>
    %82 = vector.broadcast %1 : f32 to vector<44x32xf32>
    %83 = arith.mulf %82, %79 : vector<44x32xf32>
    %84 = arith.select %81, %79, %83 : vector<44x32xi1>, vector<44x32xf32>
    %c0_106 = arith.constant 0 : index
    %c0_107 = arith.constant 0 : index
    %85 = vector.load %arg12[%c0_106, %c0_107] : memref<44x32xf32, #tpu.memory_space<vmem>>, vector<44x32xf32>
    tpu.vector_store %arg12[%c0_106, %c0_107], %84 {strides = array<i32>} : memref<44x32xf32, #tpu.memory_space<vmem>>, vector<44x32xf32>,
    %c0_108 = arith.constant 0 : index
    %c0_109 = arith.constant 0 : index
    %86 = vector.load %arg12[%c0_108, %c0_109] : memref<44x32xf32, #tpu.memory_space<vmem>>, vector<1x32xf32>
    %c0_110 = arith.constant 0 : index
    %c0_111 = arith.constant 0 : index
    %87 = vector.load %arg13[%c0_110, %c0_111] : memref<2x352xf32, #tpu.memory_space<vmem>>, vector<1x32xf32>
    tpu.vector_store %arg13[%c0_110, %c0_111], %86 {strides = array<i32>} : memref<2x352xf32, #tpu.memory_space<vmem>>, vector<1x32xf32>,
    %c2_112 = arith.constant 2 : index
    %c0_113 = arith.constant 0 : index
    %88 = vector.load %arg12[%c2_112, %c0_113] : memref<44x32xf32, #tpu.memory_space<vmem>>, vector<1x32xf32>
    %c0_114 = arith.constant 0 : index
    %c32_115 = arith.constant 32 : index
    %89 = vector.load %arg13[%c0_114, %c32_115] : memref<2x352xf32, #tpu.memory_space<vmem>>, vector<1x32xf32>
    tpu.vector_store %arg13[%c0_114, %c32_115], %88 {strides = array<i32>} : memref<2x352xf32, #tpu.memory_space<vmem>>, vector<1x32xf32>,
    %c4_116 = arith.constant 4 : index
    %c0_117 = arith.constant 0 : index
    %90 = vector.load %arg12[%c4_116, %c0_117] : memref<44x32xf32, #tpu.memory_space<vmem>>, vector<1x32xf32>
    %c0_118 = arith.constant 0 : index
    %c64_119 = arith.constant 64 : index
    %91 = vector.load %arg13[%c0_118, %c64_119] : memref<2x352xf32, #tpu.memory_space<vmem>>, vector<1x32xf32>
    tpu.vector_store %arg13[%c0_118, %c64_119], %90 {strides = array<i32>} : memref<2x352xf32, #tpu.memory_space<vmem>>, vector<1x32xf32>,
    %c6 = arith.constant 6 : index
    %c0_120 = arith.constant 0 : index
    %92 = vector.load %arg12[%c6, %c0_120] : memref<44x32xf32, #tpu.memory_space<vmem>>, vector<1x32xf32>
    %c0_121 = arith.constant 0 : index
    %c96_122 = arith.constant 96 : index
    %93 = vector.load %arg13[%c0_121, %c96_122] : memref<2x352xf32, #tpu.memory_space<vmem>>, vector<1x32xf32>
    tpu.vector_store %arg13[%c0_121, %c96_122], %92 {strides = array<i32>} : memref<2x352xf32, #tpu.memory_space<vmem>>, vector<1x32xf32>,
    %c8_123 = arith.constant 8 : index
    %c0_124 = arith.constant 0 : index
    %94 = vector.load %arg12[%c8_123, %c0_124] : memref<44x32xf32, #tpu.memory_space<vmem>>, vector<1x32xf32>
    %c0_125 = arith.constant 0 : index
    %c128_126 = arith.constant 128 : index
    %95 = vector.load %arg13[%c0_125, %c128_126] : memref<2x352xf32, #tpu.memory_space<vmem>>, vector<1x32xf32>
    tpu.vector_store %arg13[%c0_125, %c128_126], %94 {strides = array<i32>} : memref<2x352xf32, #tpu.memory_space<vmem>>, vector<1x32xf32>,
    %c10 = arith.constant 10 : index
    %c0_127 = arith.constant 0 : index
    %96 = vector.load %arg12[%c10, %c0_127] : memref<44x32xf32, #tpu.memory_space<vmem>>, vector<1x32xf32>
    %c0_128 = arith.constant 0 : index
    %c160_129 = arith.constant 160 : index
    %97 = vector.load %arg13[%c0_128, %c160_129] : memref<2x352xf32, #tpu.memory_space<vmem>>, vector<1x32xf32>
    tpu.vector_store %arg13[%c0_128, %c160_129], %96 {strides = array<i32>} : memref<2x352xf32, #tpu.memory_space<vmem>>, vector<1x32xf32>,
    %c12 = arith.constant 12 : index
    %c0_130 = arith.constant 0 : index
    %98 = vector.load %arg12[%c12, %c0_130] : memref<44x32xf32, #tpu.memory_space<vmem>>, vector<1x32xf32>
    %c0_131 = arith.constant 0 : index
    %c192 = arith.constant 192 : index
    %99 = vector.load %arg13[%c0_131, %c192] : memref<2x352xf32, #tpu.memory_space<vmem>>, vector<1x32xf32>
    tpu.vector_store %arg13[%c0_131, %c192], %98 {strides = array<i32>} : memref<2x352xf32, #tpu.memory_space<vmem>>, vector<1x32xf32>,
    %c14 = arith.constant 14 : index
    %c0_132 = arith.constant 0 : index
    %100 = vector.load %arg12[%c14, %c0_132] : memref<44x32xf32, #tpu.memory_space<vmem>>, vector<1x32xf32>
    %c0_133 = arith.constant 0 : index
    %c224 = arith.constant 224 : index
    %101 = vector.load %arg13[%c0_133, %c224] : memref<2x352xf32, #tpu.memory_space<vmem>>, vector<1x32xf32>
    tpu.vector_store %arg13[%c0_133, %c224], %100 {strides = array<i32>} : memref<2x352xf32, #tpu.memory_space<vmem>>, vector<1x32xf32>,
    %c16_134 = arith.constant 16 : index
    %c0_135 = arith.constant 0 : index
    %102 = vector.load %arg12[%c16_134, %c0_135] : memref<44x32xf32, #tpu.memory_space<vmem>>, vector<1x32xf32>
    %c0_136 = arith.constant 0 : index
    %c256 = arith.constant 256 : index
    %103 = vector.load %arg13[%c0_136, %c256] : memref<2x352xf32, #tpu.memory_space<vmem>>, vector<1x32xf32>
    tpu.vector_store %arg13[%c0_136, %c256], %102 {strides = array<i32>} : memref<2x352xf32, #tpu.memory_space<vmem>>, vector<1x32xf32>,
    %c18 = arith.constant 18 : index
    %c0_137 = arith.constant 0 : index
    %104 = vector.load %arg12[%c18, %c0_137] : memref<44x32xf32, #tpu.memory_space<vmem>>, vector<1x32xf32>
    %c0_138 = arith.constant 0 : index
    %c288 = arith.constant 288 : index
    %105 = vector.load %arg13[%c0_138, %c288] : memref<2x352xf32, #tpu.memory_space<vmem>>, vector<1x32xf32>
    tpu.vector_store %arg13[%c0_138, %c288], %104 {strides = array<i32>} : memref<2x352xf32, #tpu.memory_space<vmem>>, vector<1x32xf32>,
    %c20 = arith.constant 20 : index
    %c0_139 = arith.constant 0 : index
    %106 = vector.load %arg12[%c20, %c0_139] : memref<44x32xf32, #tpu.memory_space<vmem>>, vector<1x32xf32>
    %c0_140 = arith.constant 0 : index
    %c320 = arith.constant 320 : index
    %107 = vector.load %arg13[%c0_140, %c320] : memref<2x352xf32, #tpu.memory_space<vmem>>, vector<1x32xf32>
    tpu.vector_store %arg13[%c0_140, %c320], %106 {strides = array<i32>} : memref<2x352xf32, #tpu.memory_space<vmem>>, vector<1x32xf32>,
    %c22_141 = arith.constant 22 : index
    %c0_142 = arith.constant 0 : index
    %108 = vector.load %arg12[%c22_141, %c0_142] : memref<44x32xf32, #tpu.memory_space<vmem>>, vector<1x32xf32>
    %c1_143 = arith.constant 1 : index
    %c0_144 = arith.constant 0 : index
    %109 = vector.load %arg13[%c1_143, %c0_144] : memref<2x352xf32, #tpu.memory_space<vmem>>, vector<1x32xf32>
    tpu.vector_store %arg13[%c1_143, %c0_144], %108 {strides = array<i32>} : memref<2x352xf32, #tpu.memory_space<vmem>>, vector<1x32xf32>,
    %c24_145 = arith.constant 24 : index
    %c0_146 = arith.constant 0 : index
    %110 = vector.load %arg12[%c24_145, %c0_146] : memref<44x32xf32, #tpu.memory_space<vmem>>, vector<1x32xf32>
    %c1_147 = arith.constant 1 : index
    %c32_148 = arith.constant 32 : index
    %111 = vector.load %arg13[%c1_147, %c32_148] : memref<2x352xf32, #tpu.memory_space<vmem>>, vector<1x32xf32>
    tpu.vector_store %arg13[%c1_147, %c32_148], %110 {strides = array<i32>} : memref<2x352xf32, #tpu.memory_space<vmem>>, vector<1x32xf32>,
    %c26 = arith.constant 26 : index
    %c0_149 = arith.constant 0 : index
    %112 = vector.load %arg12[%c26, %c0_149] : memref<44x32xf32, #tpu.memory_space<vmem>>, vector<1x32xf32>
    %c1_150 = arith.constant 1 : index
    %c64_151 = arith.constant 64 : index
    %113 = vector.load %arg13[%c1_150, %c64_151] : memref<2x352xf32, #tpu.memory_space<vmem>>, vector<1x32xf32>
    tpu.vector_store %arg13[%c1_150, %c64_151], %112 {strides = array<i32>} : memref<2x352xf32, #tpu.memory_space<vmem>>, vector<1x32xf32>,
    %c28_152 = arith.constant 28 : index
    %c0_153 = arith.constant 0 : index
    %114 = vector.load %arg12[%c28_152, %c0_153] : memref<44x32xf32, #tpu.memory_space<vmem>>, vector<1x32xf32>
    %c1_154 = arith.constant 1 : index
    %c96_155 = arith.constant 96 : index
    %115 = vector.load %arg13[%c1_154, %c96_155] : memref<2x352xf32, #tpu.memory_space<vmem>>, vector<1x32xf32>
    tpu.vector_store %arg13[%c1_154, %c96_155], %114 {strides = array<i32>} : memref<2x352xf32, #tpu.memory_space<vmem>>, vector<1x32xf32>,
    %c30_156 = arith.constant 30 : index
    %c0_157 = arith.constant 0 : index
    %116 = vector.load %arg12[%c30_156, %c0_157] : memref<44x32xf32, #tpu.memory_space<vmem>>, vector<1x32xf32>
    %c1_158 = arith.constant 1 : index
    %c128_159 = arith.constant 128 : index
    %117 = vector.load %arg13[%c1_158, %c128_159] : memref<2x352xf32, #tpu.memory_space<vmem>>, vector<1x32xf32>
    tpu.vector_store %arg13[%c1_158, %c128_159], %116 {strides = array<i32>} : memref<2x352xf32, #tpu.memory_space<vmem>>, vector<1x32xf32>,
    %c32_160 = arith.constant 32 : index
    %c0_161 = arith.constant 0 : index
    %118 = vector.load %arg12[%c32_160, %c0_161] : memref<44x32xf32, #tpu.memory_space<vmem>>, vector<1x32xf32>
    %c1_162 = arith.constant 1 : index
    %c160_163 = arith.constant 160 : index
    %119 = vector.load %arg13[%c1_162, %c160_163] : memref<2x352xf32, #tpu.memory_space<vmem>>, vector<1x32xf32>
    tpu.vector_store %arg13[%c1_162, %c160_163], %118 {strides = array<i32>} : memref<2x352xf32, #tpu.memory_space<vmem>>, vector<1x32xf32>,
    %c34 = arith.constant 34 : index
    %c0_164 = arith.constant 0 : index
    %120 = vector.load %arg12[%c34, %c0_164] : memref<44x32xf32, #tpu.memory_space<vmem>>, vector<1x32xf32>
    %c1_165 = arith.constant 1 : index
    %c192_166 = arith.constant 192 : index
    %121 = vector.load %arg13[%c1_165, %c192_166] : memref<2x352xf32, #tpu.memory_space<vmem>>, vector<1x32xf32>
    tpu.vector_store %arg13[%c1_165, %c192_166], %120 {strides = array<i32>} : memref<2x352xf32, #tpu.memory_space<vmem>>, vector<1x32xf32>,
    %c36 = arith.constant 36 : index
    %c0_167 = arith.constant 0 : index
    %122 = vector.load %arg12[%c36, %c0_167] : memref<44x32xf32, #tpu.memory_space<vmem>>, vector<1x32xf32>
    %c1_168 = arith.constant 1 : index
    %c224_169 = arith.constant 224 : index
    %123 = vector.load %arg13[%c1_168, %c224_169] : memref<2x352xf32, #tpu.memory_space<vmem>>, vector<1x32xf32>
    tpu.vector_store %arg13[%c1_168, %c224_169], %122 {strides = array<i32>} : memref<2x352xf32, #tpu.memory_space<vmem>>, vector<1x32xf32>,
    %c38 = arith.constant 38 : index
    %c0_170 = arith.constant 0 : index
    %124 = vector.load %arg12[%c38, %c0_170] : memref<44x32xf32, #tpu.memory_space<vmem>>, vector<1x32xf32>
    %c1_171 = arith.constant 1 : index
    %c256_172 = arith.constant 256 : index
    %125 = vector.load %arg13[%c1_171, %c256_172] : memref<2x352xf32, #tpu.memory_space<vmem>>, vector<1x32xf32>
    tpu.vector_store %arg13[%c1_171, %c256_172], %124 {strides = array<i32>} : memref<2x352xf32, #tpu.memory_space<vmem>>, vector<1x32xf32>,
    %c40_173 = arith.constant 40 : index
    %c0_174 = arith.constant 0 : index
    %126 = vector.load %arg12[%c40_173, %c0_174] : memref<44x32xf32, #tpu.memory_space<vmem>>, vector<1x32xf32>
    %c1_175 = arith.constant 1 : index
    %c288_176 = arith.constant 288 : index
    %127 = vector.load %arg13[%c1_175, %c288_176] : memref<2x352xf32, #tpu.memory_space<vmem>>, vector<1x32xf32>
    tpu.vector_store %arg13[%c1_175, %c288_176], %126 {strides = array<i32>} : memref<2x352xf32, #tpu.memory_space<vmem>>, vector<1x32xf32>,
    %c42 = arith.constant 42 : index
    %c0_177 = arith.constant 0 : index
    %128 = vector.load %arg12[%c42, %c0_177] : memref<44x32xf32, #tpu.memory_space<vmem>>, vector<1x32xf32>
    %c1_178 = arith.constant 1 : index
    %c320_179 = arith.constant 320 : index
    %129 = vector.load %arg13[%c1_178, %c320_179] : memref<2x352xf32, #tpu.memory_space<vmem>>, vector<1x32xf32>
    tpu.vector_store %arg13[%c1_178, %c320_179], %128 {strides = array<i32>} : memref<2x352xf32, #tpu.memory_space<vmem>>, vector<1x32xf32>,
    %c0_180 = arith.constant 0 : index
    %c0_181 = arith.constant 0 : index
    %130 = vector.load %arg13[%c0_180, %c0_181] : memref<2x352xf32, #tpu.memory_space<vmem>>, vector<2x352xf32>
    %c0_182 = arith.constant 0 : index
    %c0_183 = arith.constant 0 : index
    %131 = vector.load %arg6[%c0_182, %c0_183] : memref<352x32xf32, #tpu.memory_space<vmem>>, vector<352x32xf32>
    %cst_184 = arith.constant dense<0.000000e+00> : vector<2x32xf32>
    %132 = tpu.matmul %130, %131, %cst_184 {dimension_numbers = #tpu.dot_dimension_numbers<[1], [0], [0], [1], [0, 0, 1, 1], [], []>} : vector<2x352xf32>, vector<352x32xf32>, vector<2x32xf32> -> vector<2x32xf32>
    %c0_185 = arith.constant 0 : index
    %c0_186 = arith.constant 0 : index
    %133 = vector.load %arg7[%c0_185, %c0_186] : memref<1x32xf32, #tpu.memory_space<vmem>>, vector<1x32xf32>
    %134 = vector.broadcast %133 : vector<1x32xf32> to vector<2x32xf32>
    %135 = arith.addf %132, %134 : vector<2x32xf32>
    %c0_187 = arith.constant 0 : index
    %c0_188 = arith.constant 0 : index
    %136 = vector.load %arg8[%c0_187, %c0_188] : memref<2x32xf32, #tpu.memory_space<vmem>>, vector<2x32xf32>
    tpu.vector_store %arg8[%c0_187, %c0_188], %135 {strides = array<i32>} : memref<2x32xf32, #tpu.memory_space<vmem>>, vector<2x32xf32>,
    return
  }
}

</mosaic_0001>

<llo_original>
// kernel: tpu_custom_call.1
$region0: #{tpu_custom_call.1}
  #allocation0 [shape = 'u32[]', space=smem, size = 0x4, offset = 0x4, fixed_abs, tag = 'smem constant byte address 0x4 - core index']
  #allocation1 [shape = 'u32[72,128]{1,0:T(1,128)}', space=vmem, size = 0x9000, scoped, tag = 'internal scratch']
  #allocation2 [shape = 'f32[54,48]{1,0:T(8,128)}', space=vmem, size = 0x7000, scoped, tag = 'scratch operand']
  #allocation3 [shape = 'f32[54,32]{1,0:T(8,128)}', space=vmem, size = 0x7000, scoped, tag = 'scratch operand']
  #allocation4 [shape = 'f32[44,192]{1,0:T(8,128)}', space=vmem, size = 0xc000, scoped, tag = 'scratch operand']
  #allocation5 [shape = 'f32[44,32]{1,0:T(8,128)}', space=vmem, size = 0x6000, scoped, tag = 'scratch operand']
  #allocation6 [shape = 'f32[2,352]{1,0:T(2,128)}', space=vmem, size = 0xc00, scoped, tag = 'scratch operand']
  %s0 = inlined_call_operand.vmem [shape: f32[2], index: 0, kind: input, shape index: {}]
  %s1 = inlined_call_operand.vmem [shape: f32[2,32,8], index: 1, kind: input, shape index: {}]
  %s2 = inlined_call_operand.vmem [shape: f32[48,32], index: 2, kind: input, shape index: {}]
  %s3 = inlined_call_operand.vmem [shape: f32[1,32], index: 3, kind: input, shape index: {}]
  %s4 = inlined_call_operand.vmem [shape: f32[192,32], index: 4, kind: input, shape index: {}]
  %s5 = inlined_call_operand.vmem [shape: f32[1,32], index: 5, kind: input, shape index: {}]
  %s6 = inlined_call_operand.vmem [shape: f32[352,32], index: 6, kind: input, shape index: {}]
  %s7 = inlined_call_operand.vmem [shape: f32[1,32], index: 7, kind: input, shape index: {}]
  %s8 = inlined_call_operand.hbm [shape: f32[2,32], index: 8, kind: output, shape index: {}]
  %s9 = sld [smem:[#allocation0]]
  $region46: #{tpu_custom_call.1} parent=0
    _
  %s11 = ssub.s32 1, %s9
  %s12 = scalar_select 0, %s11, %s9
  $region1: #{tpu_custom_call.1} parent=0
    #allocation7 [shape = 'u8[512]{0}', space=smem, size = 0x200, scoped, tag = 'input window, operand 0, single buffered']
    #allocation8 [shape = 's32[1]{0}', space=sflag, size = 0x4, scoped, tag = 'scoped memory for tpu_custom_call.1']
    #allocation9 [shape = 's32[1]{0}', space=sflag, size = 0x4, scoped, tag = 'scoped memory for tpu_custom_call.1']
    #allocation10 [shape = 'u8[1024]{0}', space=vmem, size = 0x400, scoped, tag = 'output window, operand 0, single buffered']
    %13 = vsyncpa [#allocation9], 0
    %14 = vsyncpa [#allocation8], 0
    // Predicated region
    $region2: #{tpu_custom_call.1} parent=1 // pred_check
      _
    $region3: #{tpu_custom_call.1} parent=1 // pred_check_branch
      %16 = sbr.rel (0) target = $region5
    $region4: #{tpu_custom_call.1} parent=1 // pred_region
      %18 = vsyncadd [#allocation9], 0
      %s20 = sshll.u32 %s0, 4
      %s21 = int_to_ptr.vmem [resolvable:$true] %s20
      %23 = dma.vmem_to_smem %s21, 16, [#allocation7], [#allocation9]
    $region5: #{tpu_custom_call.1} parent=1 // pred_fallthru
      _
    // Predicated region
    $region6: #{tpu_custom_call.1} parent=1 // pred_check
      _
    $region7: #{tpu_custom_call.1} parent=1 // pred_check_branch
      %25 = sbr.rel (0) target = $region9
    $region8: #{tpu_custom_call.1} parent=1 // pred_region
      _
    $region9: #{tpu_custom_call.1} parent=1 // pred_fallthru
      _
    // Predicated region
    $region10: #{tpu_custom_call.1} parent=1 // pred_check
      _
    $region11: #{tpu_custom_call.1} parent=1 // pred_check_branch
      %27 = sbr.rel (0) target = $region13
    $region12: #{tpu_custom_call.1} parent=1 // pred_region
      _
    $region13: #{tpu_custom_call.1} parent=1 // pred_fallthru
      _
    // Predicated region
    $region14: #{tpu_custom_call.1} parent=1 // pred_check
      _
    $region15: #{tpu_custom_call.1} parent=1 // pred_check_branch
      %29 = sbr.rel (0) target = $region17
    $region16: #{tpu_custom_call.1} parent=1 // pred_region
      _
    $region17: #{tpu_custom_call.1} parent=1 // pred_fallthru
      _
    // Predicated region
    $region18: #{tpu_custom_call.1} parent=1 // pred_check
      _
    $region19: #{tpu_custom_call.1} parent=1 // pred_check_branch
      %31 = sbr.rel (0) target = $region21
    $region20: #{tpu_custom_call.1} parent=1 // pred_region
      _
    $region21: #{tpu_custom_call.1} parent=1 // pred_fallthru
      _
    // Predicated region
    $region22: #{tpu_custom_call.1} parent=1 // pred_check
      _
    $region23: #{tpu_custom_call.1} parent=1 // pred_check_branch
      %33 = sbr.rel (0) target = $region25
    $region24: #{tpu_custom_call.1} parent=1 // pred_region
      _
    $region25: #{tpu_custom_call.1} parent=1 // pred_fallthru
      _
    // Predicated region
    $region26: #{tpu_custom_call.1} parent=1 // pred_check
      _
    $region27: #{tpu_custom_call.1} parent=1 // pred_check_branch
      %35 = sbr.rel (0) target = $region29
    $region28: #{tpu_custom_call.1} parent=1 // pred_region
      _
    $region29: #{tpu_custom_call.1} parent=1 // pred_fallthru
      _
    // Predicated region
    $region30: #{tpu_custom_call.1} parent=1 // pred_check
      _
    $region31: #{tpu_custom_call.1} parent=1 // pred_check_branch
      %37 = sbr.rel (0) target = $region33
    $region32: #{tpu_custom_call.1} parent=1 // pred_region
      _
    $region33: #{tpu_custom_call.1} parent=1 // pred_fallthru
      _
    // Predicated region
    $region34: #{tpu_custom_call.1} parent=1 // pred_check
      _
    $region35: #{tpu_custom_call.1} parent=1 // pred_check_branch
      %39 = sbr.rel (0) target = $region37
    $region36: #{tpu_custom_call.1} parent=1 // pred_region
      %41 = dma.done [#allocation9], 16
    $region37: #{tpu_custom_call.1} parent=1 // pred_fallthru
      _
    %42 = sfence
    %s43 = sld [smem:[#allocation7]]
    %s44 = sld [smem:[#allocation7 + $0x1]]
    %v45 = vld [vmem:[%s1] sm:$0xff]
    %v46 = vld [vmem:[%s1 + $0x8] sm:$0xff]
    %v47 = vld [vmem:[%s1 + $0x10] sm:$0xff]
    %v48 = vld [vmem:[%s1 + $0x18] sm:$0x7]
    %vm49 = vcmask 64512
    %50 = vst.msk [vmem:[#allocation2] sm:$0xff] %vm49, %v45
    %51 = vst.msk [vmem:[#allocation2 + $0x8] sm:$0xff] %vm49, %v46
    %52 = vst.msk [vmem:[#allocation2 + $0x10] sm:$0xff] %vm49, %v47
    %vm53 = vcmask 59392
    %54 = vst.msk [vmem:[#allocation2 + $0x18] sm:$0x7] %vm53, %v48
    %v55 = vld [vmem:[%s1 + $0x1] sm:$0xff]
    %v56 = vld [vmem:[%s1 + $0x9] sm:$0xff]
    %v57 = vld [vmem:[%s1 + $0x11] sm:$0xff]
    %v58 = vld [vmem:[%s1 + $0x19] sm:$0x7]
    %63 = vrot.lane.b32.xlu0 %v55, 8
    %v64 = vpop.permute.xlu0 %63
    %65 = vrot.lane.b32.xlu0 %v56, 8
    %v66 = vpop.permute.xlu0 %65
    %67 = vrot.lane.b32.xlu0 %v57, 8
    %v68 = vpop.permute.xlu0 %67
    %69 = vrot.lane.b32.xlu0 %v58, 8
    %v70 = vpop.permute.xlu0 %69
    %vm75 = vcmask 130112
    %76 = vst.msk [vmem:[#allocation2] sm:$0xff] %vm75, %v64
    %77 = vst.msk [vmem:[#allocation2 + $0x8] sm:$0xff] %vm75, %v66
    %78 = vst.msk [vmem:[#allocation2 + $0x10] sm:$0xff] %vm75, %v68
    %vm79 = vcmask 124992
    %80 = vst.msk [vmem:[#allocation2 + $0x18] sm:$0x7] %vm79, %v70
    %v81 = vld [vmem:[%s1 + $0x2] sm:$0xff]
    %v82 = vld [vmem:[%s1 + $0xa] sm:$0xff]
    %v83 = vld [vmem:[%s1 + $0x12] sm:$0xff]
    %v84 = vld [vmem:[%s1 + $0x1a] sm:$0x7]
    %89 = vrot.lane.b32.xlu0 %v81, 16
    %v90 = vpop.permute.xlu0 %89
    %91 = vrot.lane.b32.xlu0 %v82, 16
    %v92 = vpop.permute.xlu0 %91
    %93 = vrot.lane.b32.xlu0 %v83, 16
    %v94 = vpop.permute.xlu0 %93
    %95 = vrot.lane.b32.xlu0 %v84, 16
    %v96 = vpop.permute.xlu0 %95
    %vm101 = vcmask 195712
    %102 = vst.msk [vmem:[#allocation2] sm:$0xff] %vm101, %v90
    %103 = vst.msk [vmem:[#allocation2 + $0x8] sm:$0xff] %vm101, %v92
    %104 = vst.msk [vmem:[#allocation2 + $0x10] sm:$0xff] %vm101, %v94
    %vm105 = vcmask 190592
    %106 = vst.msk [vmem:[#allocation2 + $0x18] sm:$0x7] %vm105, %v96
    %v107 = vld [vmem:[%s1 + $0x3] sm:$0xff]
    %v108 = vld [vmem:[%s1 + $0xb] sm:$0xff]
    %v109 = vld [vmem:[%s1 + $0x13] sm:$0xff]
    %v110 = vld [vmem:[%s1 + $0x1b] sm:$0x7]
    %115 = vrot.lane.b32.xlu0 %v107, 24
    %v116 = vpop.permute.xlu0 %115
    %117 = vrot.lane.b32.xlu0 %v108, 24
    %v118 = vpop.permute.xlu0 %117
    %119 = vrot.lane.b32.xlu0 %v109, 24
    %v120 = vpop.permute.xlu0 %119
    %121 = vrot.lane.b32.xlu0 %v110, 24
    %v122 = vpop.permute.xlu0 %121
    %vm127 = vcmask 261312
    %128 = vst.msk [vmem:[#allocation2] sm:$0xff] %vm127, %v116
    %129 = vst.msk [vmem:[#allocation2 + $0x8] sm:$0xff] %vm127, %v118
    %130 = vst.msk [vmem:[#allocation2 + $0x10] sm:$0xff] %vm127, %v120
    %vm131 = vcmask 256192
    %132 = vst.msk [vmem:[#allocation2 + $0x18] sm:$0x7] %vm131, %v122
    %v133 = vld [vmem:[%s1 + $0x4] sm:$0xff]
    %v134 = vld [vmem:[%s1 + $0xc] sm:$0xff]
    %v135 = vld [vmem:[%s1 + $0x14] sm:$0xff]
    %v136 = vld [vmem:[%s1 + $0x1c] sm:$0x7]
    %141 = vrot.lane.b32.xlu0 %v133, 32
    %v142 = vpop.permute.xlu0 %141
    %143 = vrot.lane.b32.xlu0 %v134, 32
    %v144 = vpop.permute.xlu0 %143
    %145 = vrot.lane.b32.xlu0 %v135, 32
    %v146 = vpop.permute.xlu0 %145
    %147 = vrot.lane.b32.xlu0 %v136, 32
    %v148 = vpop.permute.xlu0 %147
    %vm153 = vcmask 326912
    %154 = vst.msk [vmem:[#allocation2] sm:$0xff] %vm153, %v142
    %155 = vst.msk [vmem:[#allocation2 + $0x8] sm:$0xff] %vm153, %v144
    %156 = vst.msk [vmem:[#allocation2 + $0x10] sm:$0xff] %vm153, %v146
    %vm157 = vcmask 321792
    %158 = vst.msk [vmem:[#allocation2 + $0x18] sm:$0x7] %vm157, %v148
    %v159 = vld [vmem:[%s1 + $0x5] sm:$0xff]
    %v160 = vld [vmem:[%s1 + $0xd] sm:$0xff]
    %v161 = vld [vmem:[%s1 + $0x15] sm:$0xff]
    %v162 = vld [vmem:[%s1 + $0x1d] sm:$0x7]
    %167 = vrot.lane.b32.xlu0 %v159, 40
    %v168 = vpop.permute.xlu0 %167
    %169 = vrot.lane.b32.xlu0 %v160, 40
    %v170 = vpop.permute.xlu0 %169
    %171 = vrot.lane.b32.xlu0 %v161, 40
    %v172 = vpop.permute.xlu0 %171
    %173 = vrot.lane.b32.xlu0 %v162, 40
    %v174 = vpop.permute.xlu0 %173
    %vm179 = vcmask 392512
    %180 = vst.msk [vmem:[#allocation2] sm:$0xff] %vm179, %v168
    %181 = vst.msk [vmem:[#allocation2 + $0x8] sm:$0xff] %vm179, %v170
    %182 = vst.msk [vmem:[#allocation2 + $0x10] sm:$0xff] %vm179, %v172
    %vm183 = vcmask 387392
    %184 = vst.msk [vmem:[#allocation2 + $0x18] sm:$0x7] %vm183, %v174
    %s185 = scalar_lea.vmem %s1, 32
    %v186 = vld [vmem:[%s185] sm:$0xff]
    %v187 = vld [vmem:[%s185 + $0x8] sm:$0xff]
    %v188 = vld [vmem:[%s185 + $0x10] sm:$0xff]
    %v189 = vld [vmem:[%s185 + $0x18] sm:$0x7]
    %190 = vst.msk [vmem:[#allocation2 + $0x1b] sm:$0xff] %vm49, %v186
    %191 = vst.msk [vmem:[#allocation2 + $0x23] sm:$0xff] %vm49, %v187
    %192 = vst.msk [vmem:[#allocation2 + $0x2b] sm:$0xff] %vm49, %v188
    %193 = vst.msk [vmem:[#allocation2 + $0x33] sm:$0x7] %vm53, %v189
    %v194 = vld [vmem:[%s185 + $0x1] sm:$0xff]
    %v195 = vld [vmem:[%s185 + $0x9] sm:$0xff]
    %v196 = vld [vmem:[%s185 + $0x11] sm:$0xff]
    %v197 = vld [vmem:[%s185 + $0x19] sm:$0x7]
    %202 = vrot.lane.b32.xlu0 %v194, 8
    %v203 = vpop.permute.xlu0 %202
    %204 = vrot.lane.b32.xlu0 %v195, 8
    %v205 = vpop.permute.xlu0 %204
    %206 = vrot.lane.b32.xlu0 %v196, 8
    %v207 = vpop.permute.xlu0 %206
    %208 = vrot.lane.b32.xlu0 %v197, 8
    %v209 = vpop.permute.xlu0 %208
    %214 = vst.msk [vmem:[#allocation2 + $0x1b] sm:$0xff] %vm75, %v203
    %215 = vst.msk [vmem:[#allocation2 + $0x23] sm:$0xff] %vm75, %v205
    %216 = vst.msk [vmem:[#allocation2 + $0x2b] sm:$0xff] %vm75, %v207
    %217 = vst.msk [vmem:[#allocation2 + $0x33] sm:$0x7] %vm79, %v209
    %v218 = vld [vmem:[%s185 + $0x2] sm:$0xff]
    %v219 = vld [vmem:[%s185 + $0xa] sm:$0xff]
    %v220 = vld [vmem:[%s185 + $0x12] sm:$0xff]
    %v221 = vld [vmem:[%s185 + $0x1a] sm:$0x7]
    %226 = vrot.lane.b32.xlu0 %v218, 16
    %v227 = vpop.permute.xlu0 %226
    %228 = vrot.lane.b32.xlu0 %v219, 16
    %v229 = vpop.permute.xlu0 %228
    %230 = vrot.lane.b32.xlu0 %v220, 16
    %v231 = vpop.permute.xlu0 %230
    %232 = vrot.lane.b32.xlu0 %v221, 16
    %v233 = vpop.permute.xlu0 %232
    %238 = vst.msk [vmem:[#allocation2 + $0x1b] sm:$0xff] %vm101, %v227
    %239 = vst.msk [vmem:[#allocation2 + $0x23] sm:$0xff] %vm101, %v229
    %240 = vst.msk [vmem:[#allocation2 + $0x2b] sm:$0xff] %vm101, %v231
    %241 = vst.msk [vmem:[#allocation2 + $0x33] sm:$0x7] %vm105, %v233
    %v242 = vld [vmem:[%s185 + $0x3] sm:$0xff]
    %v243 = vld [vmem:[%s185 + $0xb] sm:$0xff]
    %v244 = vld [vmem:[%s185 + $0x13] sm:$0xff]
    %v245 = vld [vmem:[%s185 + $0x1b] sm:$0x7]
    %250 = vrot.lane.b32.xlu0 %v242, 24
    %v251 = vpop.permute.xlu0 %250
    %252 = vrot.lane.b32.xlu0 %v243, 24
    %v253 = vpop.permute.xlu0 %252
    %254 = vrot.lane.b32.xlu0 %v244, 24
    %v255 = vpop.permute.xlu0 %254
    %256 = vrot.lane.b32.xlu0 %v245, 24
    %v257 = vpop.permute.xlu0 %256
    %262 = vst.msk [vmem:[#allocation2 + $0x1b] sm:$0xff] %vm127, %v251
    %263 = vst.msk [vmem:[#allocation2 + $0x23] sm:$0xff] %vm127, %v253
    %264 = vst.msk [vmem:[#allocation2 + $0x2b] sm:$0xff] %vm127, %v255
    %265 = vst.msk [vmem:[#allocation2 + $0x33] sm:$0x7] %vm131, %v257
    %v266 = vld [vmem:[%s185 + $0x4] sm:$0xff]
    %v267 = vld [vmem:[%s185 + $0xc] sm:$0xff]
    %v268 = vld [vmem:[%s185 + $0x14] sm:$0xff]
    %v269 = vld [vmem:[%s185 + $0x1c] sm:$0x7]
    %274 = vrot.lane.b32.xlu0 %v266, 32
    %v275 = vpop.permute.xlu0 %274
    %276 = vrot.lane.b32.xlu0 %v267, 32
    %v277 = vpop.permute.xlu0 %276
    %278 = vrot.lane.b32.xlu0 %v268, 32
    %v279 = vpop.permute.xlu0 %278
    %280 = vrot.lane.b32.xlu0 %v269, 32
    %v281 = vpop.permute.xlu0 %280
    %286 = vst.msk [vmem:[#allocation2 + $0x1b] sm:$0xff] %vm153, %v275
    %287 = vst.msk [vmem:[#allocation2 + $0x23] sm:$0xff] %vm153, %v277
    %288 = vst.msk [vmem:[#allocation2 + $0x2b] sm:$0xff] %vm153, %v279
    %289 = vst.msk [vmem:[#allocation2 + $0x33] sm:$0x7] %vm157, %v281
    %v290 = vld [vmem:[%s185 + $0x5] sm:$0xff]
    %v291 = vld [vmem:[%s185 + $0xd] sm:$0xff]
    %v292 = vld [vmem:[%s185 + $0x15] sm:$0xff]
    %v293 = vld [vmem:[%s185 + $0x1d] sm:$0x7]
    %298 = vrot.lane.b32.xlu0 %v290, 40
    %v299 = vpop.permute.xlu0 %298
    %300 = vrot.lane.b32.xlu0 %v291, 40
    %v301 = vpop.permute.xlu0 %300
    %302 = vrot.lane.b32.xlu0 %v292, 40
    %v303 = vpop.permute.xlu0 %302
    %304 = vrot.lane.b32.xlu0 %v293, 40
    %v305 = vpop.permute.xlu0 %304
    %310 = vst.msk [vmem:[#allocation2 + $0x1b] sm:$0xff] %vm179, %v299
    %311 = vst.msk [vmem:[#allocation2 + $0x23] sm:$0xff] %vm179, %v301
    %312 = vst.msk [vmem:[#allocation2 + $0x2b] sm:$0xff] %vm179, %v303
    %313 = vst.msk [vmem:[#allocation2 + $0x33] sm:$0x7] %vm183, %v305
    %v314 = vld [vmem:[#allocation2] sm:$0xff]
    %v315 = vld [vmem:[#allocation2 + $0x8] sm:$0xff]
    %v316 = vld [vmem:[#allocation2 + $0x10] sm:$0xff]
    %v317 = vld [vmem:[#allocation2 + $0x18] sm:$0xff]
    %v318 = vld [vmem:[#allocation2 + $0x20] sm:$0xff]
    %v319 = vld [vmem:[#allocation2 + $0x28] sm:$0xff]
    %v320 = vld [vmem:[#allocation2 + $0x30] sm:$0x3f]
    %v321 = vld [vmem:[%s2] sm:$0xff]
    %v322 = vld [vmem:[%s2 + $0x8] sm:$0xff]
    %v323 = vld [vmem:[%s2 + $0x10] sm:$0xff]
    %v324 = vld [vmem:[%s2 + $0x18] sm:$0xff]
    %v325 = vld [vmem:[%s2 + $0x20] sm:$0xff]
    %v326 = vld [vmem:[%s2 + $0x28] sm:$0xff]
    %v327 = vld [vmem:[%s3] sm:$0x1]
    %v329 = vperm.slane %v327, 0
    %vm331 = vcmask 392192
    %v333 = vsel %vm331, %v314, 0
    %v336 = vsel %vm331, %v315, 0
    %v339 = vsel %vm331, %v316, 0
    %v342 = vsel %vm331, %v317, 0
    %v345 = vsel %vm331, %v318, 0
    %v348 = vsel %vm331, %v319, 0
    %v351 = vsel %vm331, %v320, 0
    %353 = vmatpush.msra.mxu0 0.0
    %354 = vmatpush.msra.mxu0 0.0
    %355 = vmatpush.msra.mxu0 0.0
    %356 = vmatpush.msra.mxu0 0.0
    %357 = vmatpush.msra.mxu0 0.0
    %358 = vmatpush.msra.mxu0 0.0
    %359 = vmatpush.msra.mxu0 0.0
    %360 = vmatpush.msra.mxu0 0.0
    %361 = vmatpush.msra.mxu0 0.0
    %362 = vmatpush.msra.mxu0 0.0
    %363 = vmatpush.msra.mxu0 %v326
    %364 = vmatpush.msra.mxu0 %v325
    %365 = vmatpush.msra.mxu0 %v324
    %366 = vmatpush.msra.mxu0 %v323
    %367 = vmatpush.msra.mxu0 %v322
    %368 = vmatpush.msra.mxu0 %v321
    %369 = vmatmul.f32.gmra.mxu0 %v333
    %v370 = vpop.f32.mrf.mxu0
    %v371 = vadd.f32 %v329, %v370
    %372 = vmatmul.f32.gmra.mxu0 %v336
    %v373 = vpop.f32.mrf.mxu0
    %v374 = vadd.f32 %v329, %v373
    %375 = vmatmul.f32.gmra.mxu0 %v339
    %v376 = vpop.f32.mrf.mxu0
    %v377 = vadd.f32 %v329, %v376
    %378 = vmatmul.f32.gmra.mxu0 %v342
    %v379 = vpop.f32.mrf.mxu0
    %v380 = vadd.f32 %v329, %v379
    %381 = vmatmul.f32.gmra.mxu0 %v345
    %v382 = vpop.f32.mrf.mxu0
    %v383 = vadd.f32 %v329, %v382
    %384 = vmatmul.f32.gmra.mxu0 %v348
    %v385 = vpop.f32.mrf.mxu0
    %v386 = vadd.f32 %v329, %v385
    %387 = vmatmul.f32.gmra.mxu0 %v351
    %v388 = vpop.f32.mrf.mxu0
    %v389 = vadd.f32 %v329, %v388
    %390 = vdwg.mxu0
    %vm391 = vcmp.ge.f32.partialorder %v371, 0.0
    %vm392 = vcmp.ge.f32.partialorder %v374, 0.0
    %vm393 = vcmp.ge.f32.partialorder %v377, 0.0
    %vm394 = vcmp.ge.f32.partialorder %v380, 0.0
    %vm395 = vcmp.ge.f32.partialorder %v383, 0.0
    %vm396 = vcmp.ge.f32.partialorder %v386, 0.0
    %vm397 = vcmp.ge.f32.partialorder %v389, 0.0
    %v398 = vstv %s43
    %v399 = vmul.f32 %v398, %v371
    %v400 = vmul.f32 %v398, %v374
    %v401 = vmul.f32 %v398, %v377
    %v402 = vmul.f32 %v398, %v380
    %v403 = vmul.f32 %v398, %v383
    %v404 = vmul.f32 %v398, %v386
    %v405 = vmul.f32 %v398, %v389
    %v406 = vsel %vm391, %v371, %v399
    %v407 = vsel %vm392, %v374, %v400
    %v408 = vsel %vm393, %v377, %v401
    %v409 = vsel %vm394, %v380, %v402
    %v410 = vsel %vm395, %v383, %v403
    %v411 = vsel %vm396, %v386, %v404
    %v412 = vsel %vm397, %v389, %v405
    %vm413 = vcmask 261120
    %414 = vst.msk [vmem:[#allocation3] sm:$0xff] %vm413, %v406
    %415 = vst.msk [vmem:[#allocation3 + $0x8] sm:$0xff] %vm413, %v407
    %416 = vst.msk [vmem:[#allocation3 + $0x10] sm:$0xff] %vm413, %v408
    %417 = vst.msk [vmem:[#allocation3 + $0x18] sm:$0xff] %vm413, %v409
    %418 = vst.msk [vmem:[#allocation3 + $0x20] sm:$0xff] %vm413, %v410
    %419 = vst.msk [vmem:[#allocation3 + $0x28] sm:$0xff] %vm413, %v411
    %vm420 = vcmask 259072
    %421 = vst.msk [vmem:[#allocation3 + $0x30] sm:$0x3f] %vm420, %v412
    %v422 = vld [vmem:[#allocation3] sm:$0xff]
    %v423 = vld [vmem:[#allocation3 + $0x8] sm:$0xff]
    %v424 = vld [vmem:[#allocation3 + $0x10] sm:$0x3f]
    %425 = vst.msk [vmem:[#allocation4] sm:$0xff] %vm413, %v422
    %426 = vst.msk [vmem:[#allocation4 + $0x10] sm:$0xff] %vm413, %v423
    %427 = vst.msk [vmem:[#allocation4 + $0x20] sm:$0x3f] %vm420, %v424
    %v428 = vld [vmem:[#allocation3 + $0x1] sm:$0xff]
    %v429 = vld [vmem:[#allocation3 + $0x9] sm:$0xff]
    %v430 = vld [vmem:[#allocation3 + $0x11] sm:$0x3f]
    %434 = vrot.lane.b32.xlu0 %v428, 32
    %v435 = vpop.permute.xlu0 %434
    %436 = vrot.lane.b32.xlu0 %v429, 32
    %v437 = vpop.permute.xlu0 %436
    %438 = vrot.lane.b32.xlu0 %v430, 32
    %v439 = vpop.permute.xlu0 %438
    %vm443 = vcmask 523520
    %444 = vst.msk [vmem:[#allocation4] sm:$0xff] %vm443, %v435
    %445 = vst.msk [vmem:[#allocation4 + $0x10] sm:$0xff] %vm443, %v437
    %vm446 = vcmask 521472
    %447 = vst.msk [vmem:[#allocation4 + $0x20] sm:$0x3f] %vm446, %v439
    %v448 = vld [vmem:[#allocation3 + $0x2] sm:$0xff]
    %v449 = vld [vmem:[#allocation3 + $0xa] sm:$0xff]
    %v450 = vld [vmem:[#allocation3 + $0x12] sm:$0x3f]
    %454 = vrot.lane.b32.xlu0 %v448, 64
    %v455 = vpop.permute.xlu0 %454
    %456 = vrot.lane.b32.xlu0 %v449, 64
    %v457 = vpop.permute.xlu0 %456
    %458 = vrot.lane.b32.xlu0 %v450, 64
    %v459 = vpop.permute.xlu0 %458
    %vm463 = vcmask 785920
    %464 = vst.msk [vmem:[#allocation4] sm:$0xff] %vm463, %v455
    %465 = vst.msk [vmem:[#allocation4 + $0x10] sm:$0xff] %vm463, %v457
    %vm466 = vcmask 783872
    %467 = vst.msk [vmem:[#allocation4 + $0x20] sm:$0x3f] %vm466, %v459
    %v468 = vld [vmem:[#allocation3 + $0x3] sm:$0xff]
    %v469 = vld [vmem:[#allocation3 + $0xb] sm:$0xff]
    %v470 = vld [vmem:[#allocation3 + $0x13] sm:$0x3f]
    %474 = vrot.lane.b32.xlu0 %v468, 96
    %v475 = vpop.permute.xlu0 %474
    %476 = vrot.lane.b32.xlu0 %v469, 96
    %v477 = vpop.permute.xlu0 %476
    %478 = vrot.lane.b32.xlu0 %v470, 96
    %v479 = vpop.permute.xlu0 %478
    %vm483 = vcmask 1048320
    %484 = vst.msk [vmem:[#allocation4] sm:$0xff] %vm483, %v475
    %485 = vst.msk [vmem:[#allocation4 + $0x10] sm:$0xff] %vm483, %v477
    %vm486 = vcmask 1046272
    %487 = vst.msk [vmem:[#allocation4 + $0x20] sm:$0x3f] %vm486, %v479
    %v488 = vld [vmem:[#allocation3 + $0x4] sm:$0xff]
    %v489 = vld [vmem:[#allocation3 + $0xc] sm:$0xff]
    %v490 = vld [vmem:[#allocation3 + $0x14] sm:$0x3f]
    %491 = vst.msk [vmem:[#allocation4 + $0x8] sm:$0xff] %vm413, %v488
    %492 = vst.msk [vmem:[#allocation4 + $0x18] sm:$0xff] %vm413, %v489
    %493 = vst.msk [vmem:[#allocation4 + $0x28] sm:$0x3f] %vm420, %v490
    %v494 = vld [vmem:[#allocation3 + $0x5] sm:$0xff]
    %v495 = vld [vmem:[#allocation3 + $0xd] sm:$0xff]
    %v496 = vld [vmem:[#allocation3 + $0x15] sm:$0x3f]
    %500 = vrot.lane.b32.xlu0 %v494, 32
    %v501 = vpop.permute.xlu0 %500
    %502 = vrot.lane.b32.xlu0 %v495, 32
    %v503 = vpop.permute.xlu0 %502
    %504 = vrot.lane.b32.xlu0 %v496, 32
    %v505 = vpop.permute.xlu0 %504
    %509 = vst.msk [vmem:[#allocation4 + $0x8] sm:$0xff] %vm443, %v501
    %510 = vst.msk [vmem:[#allocation4 + $0x18] sm:$0xff] %vm443, %v503
    %511 = vst.msk [vmem:[#allocation4 + $0x28] sm:$0x3f] %vm446, %v505
    %v512 = vld [vmem:[#allocation3 + $0x1b] sm:$0xff]
    %v513 = vld [vmem:[#allocation3 + $0x23] sm:$0xff]
    %v514 = vld [vmem:[#allocation3 + $0x2b] sm:$0x3f]
    %vm518 = vcmask 1045504
    %v519 = vrot.slane %v512, 2
    %v520 = vrot.slane %v513, 2
    %v521 = vsel %vm518, %v519, %v520
    %v522 = vrot.slane %v514, 2
    %v523 = vsel %vm518, %v520, %v522
    %vm528 = vcmask 261126
    %529 = vst.msk [vmem:[#allocation4 + $0x20] sm:$0xc0] %vm528, %v519
    %530 = vst.msk [vmem:[#allocation4 + $0x30] sm:$0xff] %vm413, %v521
    %531 = vst.msk [vmem:[#allocation4 + $0x40] sm:$0xff] %vm413, %v523
    %vm532 = vcmask 257024
    %533 = vst.msk [vmem:[#allocation4 + $0x50] sm:$0xf] %vm532, %v522
    %v534 = vld [vmem:[#allocation3 + $0x1c] sm:$0xff]
    %v535 = vld [vmem:[#allocation3 + $0x24] sm:$0xff]
    %v536 = vld [vmem:[#allocation3 + $0x2c] sm:$0x3f]
    %v540 = vrot.slane %v534, 2
    %v541 = vrot.slane %v535, 2
    %v542 = vsel %vm518, %v540, %v541
    %v543 = vrot.slane %v536, 2
    %v544 = vsel %vm518, %v541, %v543
    %545 = vrot.lane.b32.xlu0 %v540, 32
    %v546 = vpop.permute.xlu0 %545
    %547 = vrot.lane.b32.xlu0 %v542, 32
    %v548 = vpop.permute.xlu0 %547
    %549 = vrot.lane.b32.xlu0 %v544, 32
    %v550 = vpop.permute.xlu0 %549
    %551 = vrot.lane.b32.xlu0 %v543, 32
    %v552 = vpop.permute.xlu0 %551
    %vm557 = vcmask 523526
    %558 = vst.msk [vmem:[#allocation4 + $0x20] sm:$0xc0] %vm557, %v546
    %559 = vst.msk [vmem:[#allocation4 + $0x30] sm:$0xff] %vm443, %v548
    %560 = vst.msk [vmem:[#allocation4 + $0x40] sm:$0xff] %vm443, %v550
    %vm561 = vcmask 519424
    %562 = vst.msk [vmem:[#allocation4 + $0x50] sm:$0xf] %vm561, %v552
    %v563 = vld [vmem:[#allocation3 + $0x1d] sm:$0xff]
    %v564 = vld [vmem:[#allocation3 + $0x25] sm:$0xff]
    %v565 = vld [vmem:[#allocation3 + $0x2d] sm:$0x3f]
    %v569 = vrot.slane %v563, 2
    %v570 = vrot.slane %v564, 2
    %v571 = vsel %vm518, %v569, %v570
    %v572 = vrot.slane %v565, 2
    %v573 = vsel %vm518, %v570, %v572
    %574 = vrot.lane.b32.xlu0 %v569, 64
    %v575 = vpop.permute.xlu0 %574
    %576 = vrot.lane.b32.xlu0 %v571, 64
    %v577 = vpop.permute.xlu0 %576
    %578 = vrot.lane.b32.xlu0 %v573, 64
    %v579 = vpop.permute.xlu0 %578
    %580 = vrot.lane.b32.xlu0 %v572, 64
    %v581 = vpop.permute.xlu0 %580
    %vm586 = vcmask 785926
    %587 = vst.msk [vmem:[#allocation4 + $0x20] sm:$0xc0] %vm586, %v575
    %588 = vst.msk [vmem:[#allocation4 + $0x30] sm:$0xff] %vm463, %v577
    %589 = vst.msk [vmem:[#allocation4 + $0x40] sm:$0xff] %vm463, %v579
    %vm590 = vcmask 781824
    %591 = vst.msk [vmem:[#allocation4 + $0x50] sm:$0xf] %vm590, %v581
    %v592 = vld [vmem:[#allocation3 + $0x1e] sm:$0xff]
    %v593 = vld [vmem:[#allocation3 + $0x26] sm:$0xff]
    %v594 = vld [vmem:[#allocation3 + $0x2e] sm:$0x3f]
    %v598 = vrot.slane %v592, 2
    %v599 = vrot.slane %v593, 2
    %v600 = vsel %vm518, %v598, %v599
    %v601 = vrot.slane %v594, 2
    %v602 = vsel %vm518, %v599, %v601
    %603 = vrot.lane.b32.xlu0 %v598, 96
    %v604 = vpop.permute.xlu0 %603
    %605 = vrot.lane.b32.xlu0 %v600, 96
    %v606 = vpop.permute.xlu0 %605
    %607 = vrot.lane.b32.xlu0 %v602, 96
    %v608 = vpop.permute.xlu0 %607
    %609 = vrot.lane.b32.xlu0 %v601, 96
    %v610 = vpop.permute.xlu0 %609
    %vm615 = vcmask 1048326
    %616 = vst.msk [vmem:[#allocation4 + $0x20] sm:$0xc0] %vm615, %v604
    %617 = vst.msk [vmem:[#allocation4 + $0x30] sm:$0xff] %vm483, %v606
    %618 = vst.msk [vmem:[#allocation4 + $0x40] sm:$0xff] %vm483, %v608
    %vm619 = vcmask 1044224
    %620 = vst.msk [vmem:[#allocation4 + $0x50] sm:$0xf] %vm619, %v610
    %v621 = vld [vmem:[#allocation3 + $0x1f] sm:$0xff]
    %v622 = vld [vmem:[#allocation3 + $0x27] sm:$0xff]
    %v623 = vld [vmem:[#allocation3 + $0x2f] sm:$0x3f]
    %v627 = vrot.slane %v621, 2
    %v628 = vrot.slane %v622, 2
    %v629 = vsel %vm518, %v627, %v628
    %v630 = vrot.slane %v623, 2
    %v631 = vsel %vm518, %v628, %v630
    %636 = vst.msk [vmem:[#allocation4 + $0x28] sm:$0xc0] %vm528, %v627
    %637 = vst.msk [vmem:[#allocation4 + $0x38] sm:$0xff] %vm413, %v629
    %638 = vst.msk [vmem:[#allocation4 + $0x48] sm:$0xff] %vm413, %v631
    %639 = vst.msk [vmem:[#allocation4 + $0x58] sm:$0xf] %vm532, %v630
    %v640 = vld [vmem:[#allocation3 + $0x20] sm:$0xff]
    %v641 = vld [vmem:[#allocation3 + $0x28] sm:$0xff]
    %v642 = vld [vmem:[#allocation3 + $0x30] sm:$0x3f]
    %v646 = vrot.slane %v640, 2
    %v647 = vrot.slane %v641, 2
    %v648 = vsel %vm518, %v646, %v647
    %v649 = vrot.slane %v642, 2
    %v650 = vsel %vm518, %v647, %v649
    %651 = vrot.lane.b32.xlu0 %v646, 32
    %v652 = vpop.permute.xlu0 %651
    %653 = vrot.lane.b32.xlu0 %v648, 32
    %v654 = vpop.permute.xlu0 %653
    %655 = vrot.lane.b32.xlu0 %v650, 32
    %v656 = vpop.permute.xlu0 %655
    %657 = vrot.lane.b32.xlu0 %v649, 32
    %v658 = vpop.permute.xlu0 %657
    %663 = vst.msk [vmem:[#allocation4 + $0x28] sm:$0xc0] %vm557, %v652
    %664 = vst.msk [vmem:[#allocation4 + $0x38] sm:$0xff] %vm443, %v654
    %665 = vst.msk [vmem:[#allocation4 + $0x48] sm:$0xff] %vm443, %v656
    %666 = vst.msk [vmem:[#allocation4 + $0x58] sm:$0xf] %vm561, %v658
    %v667 = vld [vmem:[#allocation4] sm:$0xff]
    %v668 = vld [vmem:[#allocation4 + $0x8] sm:$0xff]
    %v669 = vld [vmem:[#allocation4 + $0x10] sm:$0xff]
    %v670 = vld [vmem:[#allocation4 + $0x18] sm:$0xff]
    %v671 = vld [vmem:[#allocation4 + $0x20] sm:$0xff]
    %v672 = vld [vmem:[#allocation4 + $0x28] sm:$0xff]
    %v673 = vld [vmem:[#allocation4 + $0x30] sm:$0xff]
    %v674 = vld [vmem:[#allocation4 + $0x38] sm:$0xff]
    %v675 = vld [vmem:[#allocation4 + $0x40] sm:$0xff]
    %v676 = vld [vmem:[#allocation4 + $0x48] sm:$0xff]
    %v677 = vld [vmem:[#allocation4 + $0x50] sm:$0xf]
    %v678 = vld [vmem:[#allocation4 + $0x58] sm:$0xf]
    %v679 = vld [vmem:[%s4] sm:$0xff]
    %v680 = vld [vmem:[%s4 + $0x8] sm:$0xff]
    %v681 = vld [vmem:[%s4 + $0x10] sm:$0xff]
    %v682 = vld [vmem:[%s4 + $0x18] sm:$0xff]
    %v683 = vld [vmem:[%s4 + $0x20] sm:$0xff]
    %v684 = vld [vmem:[%s4 + $0x28] sm:$0xff]
    %v685 = vld [vmem:[%s4 + $0x30] sm:$0xff]
    %v686 = vld [vmem:[%s4 + $0x38] sm:$0xff]
    %v687 = vld [vmem:[%s4 + $0x40] sm:$0xff]
    %v688 = vld [vmem:[%s4 + $0x48] sm:$0xff]
    %v689 = vld [vmem:[%s4 + $0x50] sm:$0xff]
    %v690 = vld [vmem:[%s4 + $0x58] sm:$0xff]
    %v691 = vld [vmem:[%s4 + $0x60] sm:$0xff]
    %v692 = vld [vmem:[%s4 + $0x68] sm:$0xff]
    %v693 = vld [vmem:[%s4 + $0x70] sm:$0xff]
    %v694 = vld [vmem:[%s4 + $0x78] sm:$0xff]
    %v695 = vld [vmem:[%s4 + $0x80] sm:$0xff]
    %v696 = vld [vmem:[%s4 + $0x88] sm:$0xff]
    %v697 = vld [vmem:[%s4 + $0x90] sm:$0xff]
    %v698 = vld [vmem:[%s4 + $0x98] sm:$0xff]
    %v699 = vld [vmem:[%s4 + $0xa0] sm:$0xff]
    %v700 = vld [vmem:[%s4 + $0xa8] sm:$0xff]
    %v701 = vld [vmem:[%s4 + $0xb0] sm:$0xff]
    %v702 = vld [vmem:[%s4 + $0xb8] sm:$0xff]
    %v703 = vld [vmem:[%s5] sm:$0x1]
    %v705 = vperm.slane %v703, 0
    %vm707 = vcmask 523264
    %v709 = vsel %vm707, %v668, 0
    %v712 = vsel %vm707, %v670, 0
    %v715 = vsel %vm707, %v672, 0
    %v718 = vsel %vm707, %v674, 0
    %v721 = vsel %vm707, %v676, 0
    %v724 = vsel %vm707, %v678, 0
    %726 = vmatpush.msra.mxu0 %v694
    %727 = vmatpush.msra.mxu0 %v693
    %728 = vmatpush.msra.mxu0 %v692
    %729 = vmatpush.msra.mxu0 %v691
    %730 = vmatpush.msra.mxu0 %v690
    %731 = vmatpush.msra.mxu0 %v689
    %732 = vmatpush.msra.mxu0 %v688
    %733 = vmatpush.msra.mxu0 %v687
    %734 = vmatpush.msra.mxu0 %v686
    %735 = vmatpush.msra.mxu0 %v685
    %736 = vmatpush.msra.mxu0 %v684
    %737 = vmatpush.msra.mxu0 %v683
    %738 = vmatpush.msra.mxu0 %v682
    %739 = vmatpush.msra.mxu0 %v681
    %740 = vmatpush.msra.mxu0 %v680
    %741 = vmatpush.msra.mxu0 %v679
    %742 = vmatmul.f32.gmra.mxu0 %v667
    %v743 = vpop.f32.mrf.mxu0
    %v744 = vadd.f32 %v705, %v743
    %745 = vmatmul.f32.gmra.mxu0 %v669
    %v746 = vpop.f32.mrf.mxu0
    %v747 = vadd.f32 %v705, %v746
    %748 = vmatmul.f32.gmra.mxu0 %v671
    %v749 = vpop.f32.mrf.mxu0
    %v750 = vadd.f32 %v705, %v749
    %751 = vmatmul.f32.gmra.mxu0 %v673
    %v752 = vpop.f32.mrf.mxu0
    %v753 = vadd.f32 %v705, %v752
    %754 = vmatmul.f32.gmra.mxu0 %v675
    %v755 = vpop.f32.mrf.mxu0
    %v756 = vadd.f32 %v705, %v755
    %757 = vmatmul.f32.gmra.mxu0 %v677
    %v758 = vpop.f32.mrf.mxu0
    %v759 = vadd.f32 %v705, %v758
    %760 = vdwg.mxu0
    %761 = vmatpush.msra.mxu0 0.0
    %762 = vmatpush.msra.mxu0 0.0
    %763 = vmatpush.msra.mxu0 0.0
    %764 = vmatpush.msra.mxu0 0.0
    %765 = vmatpush.msra.mxu0 0.0
    %766 = vmatpush.msra.mxu0 0.0
    %767 = vmatpush.msra.mxu0 0.0
    %768 = vmatpush.msra.mxu0 0.0
    %769 = vmatpush.msra.mxu0 %v702
    %770 = vmatpush.msra.mxu0 %v701
    %771 = vmatpush.msra.mxu0 %v700
    %772 = vmatpush.msra.mxu0 %v699
    %773 = vmatpush.msra.mxu0 %v698
    %774 = vmatpush.msra.mxu0 %v697
    %775 = vmatpush.msra.mxu0 %v696
    %776 = vmatpush.msra.mxu0 %v695
    %777 = vmatmul.f32.gmra.mxu0 %v709
    %v778 = vpop.f32.mrf.mxu0
    %v779 = vadd.f32 %v744, %v778
    %780 = vmatmul.f32.gmra.mxu0 %v712
    %v781 = vpop.f32.mrf.mxu0
    %v782 = vadd.f32 %v747, %v781
    %783 = vmatmul.f32.gmra.mxu0 %v715
    %v784 = vpop.f32.mrf.mxu0
    %v785 = vadd.f32 %v750, %v784
    %786 = vmatmul.f32.gmra.mxu0 %v718
    %v787 = vpop.f32.mrf.mxu0
    %v788 = vadd.f32 %v753, %v787
    %789 = vmatmul.f32.gmra.mxu0 %v721
    %v790 = vpop.f32.mrf.mxu0
    %v791 = vadd.f32 %v756, %v790
    %792 = vmatmul.f32.gmra.mxu0 %v724
    %v793 = vpop.f32.mrf.mxu0
    %v794 = vadd.f32 %v759, %v793
    %795 = vdwg.mxu0
    %vm796 = vcmp.ge.f32.partialorder %v779, 0.0
    %vm797 = vcmp.ge.f32.partialorder %v782, 0.0
    %vm798 = vcmp.ge.f32.partialorder %v785, 0.0
    %vm799 = vcmp.ge.f32.partialorder %v788, 0.0
    %vm800 = vcmp.ge.f32.partialorder %v791, 0.0
    %vm801 = vcmp.ge.f32.partialorder %v794, 0.0
    %v802 = vstv %s44
    %v803 = vmul.f32 %v802, %v779
    %v804 = vmul.f32 %v802, %v782
    %v805 = vmul.f32 %v802, %v785
    %v806 = vmul.f32 %v802, %v788
    %v807 = vmul.f32 %v802, %v791
    %v808 = vmul.f32 %v802, %v794
    %v809 = vsel %vm796, %v779, %v803
    %v810 = vsel %vm797, %v782, %v804
    %v811 = vsel %vm798, %v785, %v805
    %v812 = vsel %vm799, %v788, %v806
    %v813 = vsel %vm800, %v791, %v807
    %v814 = vsel %vm801, %v794, %v808
    %815 = vst.msk [vmem:[#allocation5] sm:$0xff] %vm413, %v809
    %816 = vst.msk [vmem:[#allocation5 + $0x8] sm:$0xff] %vm413, %v810
    %817 = vst.msk [vmem:[#allocation5 + $0x10] sm:$0xff] %vm413, %v811
    %818 = vst.msk [vmem:[#allocation5 + $0x18] sm:$0xff] %vm413, %v812
    %819 = vst.msk [vmem:[#allocation5 + $0x20] sm:$0xff] %vm413, %v813
    %820 = vst.msk [vmem:[#allocation5 + $0x28] sm:$0xf] %vm532, %v814
    %v821 = vld [vmem:[#allocation5] sm:$0x1]
    %vm822 = vcmask 253952
    %823 = vst.msk [vmem:[#allocation6] sm:$0x1] %vm822, %v821
    %v824 = vld [vmem:[#allocation5 + $0x2] sm:$0x1]
    %826 = vrot.lane.b32.xlu0 %v824, 32
    %v827 = vpop.permute.xlu0 %826
    %vm829 = vcmask 516352
    %830 = vst.msk [vmem:[#allocation6] sm:$0x1] %vm829, %v827
    %v831 = vld [vmem:[#allocation5 + $0x4] sm:$0x1]
    %833 = vrot.lane.b32.xlu0 %v831, 64
    %v834 = vpop.permute.xlu0 %833
    %vm836 = vcmask 778752
    %837 = vst.msk [vmem:[#allocation6] sm:$0x1] %vm836, %v834
    %v838 = vld [vmem:[#allocation5 + $0x6] sm:$0x1]
    %840 = vrot.lane.b32.xlu0 %v838, 96
    %v841 = vpop.permute.xlu0 %840
    %vm843 = vcmask 1041152
    %844 = vst.msk [vmem:[#allocation6] sm:$0x1] %vm843, %v841
    %v845 = vld [vmem:[#allocation5 + $0x8] sm:$0x1]
    %846 = vst.msk [vmem:[#allocation6 + $0x2] sm:$0x1] %vm822, %v845
    %v847 = vld [vmem:[#allocation5 + $0xa] sm:$0x1]
    %849 = vrot.lane.b32.xlu0 %v847, 32
    %v850 = vpop.permute.xlu0 %849
    %852 = vst.msk [vmem:[#allocation6 + $0x2] sm:$0x1] %vm829, %v850
    %v853 = vld [vmem:[#allocation5 + $0xc] sm:$0x1]
    %855 = vrot.lane.b32.xlu0 %v853, 64
    %v856 = vpop.permute.xlu0 %855
    %858 = vst.msk [vmem:[#allocation6 + $0x2] sm:$0x1] %vm836, %v856
    %v859 = vld [vmem:[#allocation5 + $0xe] sm:$0x1]
    %861 = vrot.lane.b32.xlu0 %v859, 96
    %v862 = vpop.permute.xlu0 %861
    %864 = vst.msk [vmem:[#allocation6 + $0x2] sm:$0x1] %vm843, %v862
    %v865 = vld [vmem:[#allocation5 + $0x10] sm:$0x1]
    %866 = vst.msk [vmem:[#allocation6 + $0x4] sm:$0x1] %vm822, %v865
    %v867 = vld [vmem:[#allocation5 + $0x12] sm:$0x1]
    %869 = vrot.lane.b32.xlu0 %v867, 32
    %v870 = vpop.permute.xlu0 %869
    %872 = vst.msk [vmem:[#allocation6 + $0x4] sm:$0x1] %vm829, %v870
    %v873 = vld [vmem:[#allocation5 + $0x14] sm:$0x1]
    %875 = vrot.lane.b32.xlu0 %v873, 64
    %v876 = vpop.permute.xlu0 %875
    %878 = vst.msk [vmem:[#allocation6 + $0x4] sm:$0x1] %vm836, %v876
    %v879 = vld [vmem:[#allocation5 + $0x16] sm:$0x1]
    %880 = vst.msk [vmem:[#allocation6 + $0x1] sm:$0x1] %vm822, %v879
    %v881 = vld [vmem:[#allocation5 + $0x18] sm:$0x1]
    %883 = vrot.lane.b32.xlu0 %v881, 32
    %v884 = vpop.permute.xlu0 %883
    %886 = vst.msk [vmem:[#allocation6 + $0x1] sm:$0x1] %vm829, %v884
    %v887 = vld [vmem:[#allocation5 + $0x1a] sm:$0x1]
    %889 = vrot.lane.b32.xlu0 %v887, 64
    %v890 = vpop.permute.xlu0 %889
    %892 = vst.msk [vmem:[#allocation6 + $0x1] sm:$0x1] %vm836, %v890
    %v893 = vld [vmem:[#allocation5 + $0x1c] sm:$0x1]
    %895 = vrot.lane.b32.xlu0 %v893, 96
    %v896 = vpop.permute.xlu0 %895
    %898 = vst.msk [vmem:[#allocation6 + $0x1] sm:$0x1] %vm843, %v896
    %v899 = vld [vmem:[#allocation5 + $0x1e] sm:$0x1]
    %900 = vst.msk [vmem:[#allocation6 + $0x3] sm:$0x1] %vm822, %v899
    %v901 = vld [vmem:[#allocation5 + $0x20] sm:$0x1]
    %903 = vrot.lane.b32.xlu0 %v901, 32
    %v904 = vpop.permute.xlu0 %903
    %906 = vst.msk [vmem:[#allocation6 + $0x3] sm:$0x1] %vm829, %v904
    %v907 = vld [vmem:[#allocation5 + $0x22] sm:$0x1]
    %909 = vrot.lane.b32.xlu0 %v907, 64
    %v910 = vpop.permute.xlu0 %909
    %912 = vst.msk [vmem:[#allocation6 + $0x3] sm:$0x1] %vm836, %v910
    %v913 = vld [vmem:[#allocation5 + $0x24] sm:$0x1]
    %915 = vrot.lane.b32.xlu0 %v913, 96
    %v916 = vpop.permute.xlu0 %915
    %918 = vst.msk [vmem:[#allocation6 + $0x3] sm:$0x1] %vm843, %v916
    %v919 = vld [vmem:[#allocation5 + $0x26] sm:$0x1]
    %920 = vst.msk [vmem:[#allocation6 + $0x5] sm:$0x1] %vm822, %v919
    %v921 = vld [vmem:[#allocation5 + $0x28] sm:$0x1]
    %923 = vrot.lane.b32.xlu0 %v921, 32
    %v924 = vpop.permute.xlu0 %923
    %926 = vst.msk [vmem:[#allocation6 + $0x5] sm:$0x1] %vm829, %v924
    %v927 = vld [vmem:[#allocation5 + $0x2a] sm:$0x1]
    %929 = vrot.lane.b32.xlu0 %v927, 64
    %v930 = vpop.permute.xlu0 %929
    %932 = vst.msk [vmem:[#allocation6 + $0x5] sm:$0x1] %vm836, %v930
    %v933 = vld [vmem:[#allocation6] sm:$0x3f]
    %v934 = vld [vmem:[%s6] sm:$0xff]
    %v935 = vld [vmem:[%s6 + $0x8] sm:$0xff]
    %v936 = vld [vmem:[%s6 + $0x10] sm:$0xff]
    %v937 = vld [vmem:[%s6 + $0x18] sm:$0xff]
    %v938 = vld [vmem:[%s6 + $0x20] sm:$0xff]
    %v939 = vld [vmem:[%s6 + $0x28] sm:$0xff]
    %v940 = vld [vmem:[%s6 + $0x30] sm:$0xff]
    %v941 = vld [vmem:[%s6 + $0x38] sm:$0xff]
    %v942 = vld [vmem:[%s6 + $0x40] sm:$0xff]
    %v943 = vld [vmem:[%s6 + $0x48] sm:$0xff]
    %v944 = vld [vmem:[%s6 + $0x50] sm:$0xff]
    %v945 = vld [vmem:[%s6 + $0x58] sm:$0xff]
    %v946 = vld [vmem:[%s6 + $0x60] sm:$0xff]
    %v947 = vld [vmem:[%s6 + $0x68] sm:$0xff]
    %v948 = vld [vmem:[%s6 + $0x70] sm:$0xff]
    %v949 = vld [vmem:[%s6 + $0x78] sm:$0xff]
    %v950 = vld [vmem:[%s6 + $0x80] sm:$0xff]
    %v951 = vld [vmem:[%s6 + $0x88] sm:$0xff]
    %v952 = vld [vmem:[%s6 + $0x90] sm:$0xff]
    %v953 = vld [vmem:[%s6 + $0x98] sm:$0xff]
    %v954 = vld [vmem:[%s6 + $0xa0] sm:$0xff]
    %v955 = vld [vmem:[%s6 + $0xa8] sm:$0xff]
    %v956 = vld [vmem:[%s6 + $0xb0] sm:$0xff]
    %v957 = vld [vmem:[%s6 + $0xb8] sm:$0xff]
    %v958 = vld [vmem:[%s6 + $0xc0] sm:$0xff]
    %v959 = vld [vmem:[%s6 + $0xc8] sm:$0xff]
    %v960 = vld [vmem:[%s6 + $0xd0] sm:$0xff]
    %v961 = vld [vmem:[%s6 + $0xd8] sm:$0xff]
    %v962 = vld [vmem:[%s6 + $0xe0] sm:$0xff]
    %v963 = vld [vmem:[%s6 + $0xe8] sm:$0xff]
    %v964 = vld [vmem:[%s6 + $0xf0] sm:$0xff]
    %v965 = vld [vmem:[%s6 + $0xf8] sm:$0xff]
    %v966 = vld [vmem:[%s6 + $0x100] sm:$0xff]
    %v967 = vld [vmem:[%s6 + $0x108] sm:$0xff]
    %v968 = vld [vmem:[%s6 + $0x110] sm:$0xff]
    %v969 = vld [vmem:[%s6 + $0x118] sm:$0xff]
    %v970 = vld [vmem:[%s6 + $0x120] sm:$0xff]
    %v971 = vld [vmem:[%s6 + $0x128] sm:$0xff]
    %v972 = vld [vmem:[%s6 + $0x130] sm:$0xff]
    %v973 = vld [vmem:[%s6 + $0x138] sm:$0xff]
    %v974 = vld [vmem:[%s6 + $0x140] sm:$0xff]
    %v975 = vld [vmem:[%s6 + $0x148] sm:$0xff]
    %v976 = vld [vmem:[%s6 + $0x150] sm:$0xff]
    %v977 = vld [vmem:[%s6 + $0x158] sm:$0xff]
    %v978 = vld [vmem:[%s7] sm:$0x1]
    %v980 = vperm.slane %v978, 0
    %983 = vst [vmem:[#allocation1] ss:$4 sm:$0xff] %v933
    %v984 = vld.sshfl [vmem:[#allocation1] sm:$0xff pattern:$0x73625140]
    %v985 = vld.sshfl [vmem:[#allocation1 + $0x8] sm:$0xff pattern:$0x73625140]
    %v986 = vld.sshfl [vmem:[#allocation1 + $0x10] sm:$0xff pattern:$0x73625140]
    %vm989 = vcmask 785408
    %v990 = vsel %vm989, %v986, 0
    %992 = vmatpush.msra.mxu0 %v949
    %993 = vmatpush.msra.mxu0 %v948
    %994 = vmatpush.msra.mxu0 %v947
    %995 = vmatpush.msra.mxu0 %v946
    %996 = vmatpush.msra.mxu0 %v945
    %997 = vmatpush.msra.mxu0 %v944
    %998 = vmatpush.msra.mxu0 %v943
    %999 = vmatpush.msra.mxu0 %v942
    %1000 = vmatpush.msra.mxu0 %v941
    %1001 = vmatpush.msra.mxu0 %v940
    %1002 = vmatpush.msra.mxu0 %v939
    %1003 = vmatpush.msra.mxu0 %v938
    %1004 = vmatpush.msra.mxu0 %v937
    %1005 = vmatpush.msra.mxu0 %v936
    %1006 = vmatpush.msra.mxu0 %v935
    %1007 = vmatpush.msra.mxu0 %v934
    %1008 = vmatmul.f32.gmra.mxu0 %v984
    %v1009 = vpop.f32.mrf.mxu0
    %v1010 = vadd.f32 %v980, %v1009
    %1011 = vdwg.mxu0
    %1012 = vmatpush.msra.mxu0 %v965
    %1013 = vmatpush.msra.mxu0 %v964
    %1014 = vmatpush.msra.mxu0 %v963
    %1015 = vmatpush.msra.mxu0 %v962
    %1016 = vmatpush.msra.mxu0 %v961
    %1017 = vmatpush.msra.mxu0 %v960
    %1018 = vmatpush.msra.mxu0 %v959
    %1019 = vmatpush.msra.mxu0 %v958
    %1020 = vmatpush.msra.mxu0 %v957
    %1021 = vmatpush.msra.mxu0 %v956
    %1022 = vmatpush.msra.mxu0 %v955
    %1023 = vmatpush.msra.mxu0 %v954
    %1024 = vmatpush.msra.mxu0 %v953
    %1025 = vmatpush.msra.mxu0 %v952
    %1026 = vmatpush.msra.mxu0 %v951
    %1027 = vmatpush.msra.mxu0 %v950
    %1028 = vmatmul.f32.gmra.mxu0 %v985
    %v1029 = vpop.f32.mrf.mxu0
    %v1030 = vadd.f32 %v1010, %v1029
    %1031 = vdwg.mxu0
    %1032 = vmatpush.msra.mxu0 0.0
    %1033 = vmatpush.msra.mxu0 0.0
    %1034 = vmatpush.msra.mxu0 0.0
    %1035 = vmatpush.msra.mxu0 0.0
    %1036 = vmatpush.msra.mxu0 %v977
    %1037 = vmatpush.msra.mxu0 %v976
    %1038 = vmatpush.msra.mxu0 %v975
    %1039 = vmatpush.msra.mxu0 %v974
    %1040 = vmatpush.msra.mxu0 %v973
    %1041 = vmatpush.msra.mxu0 %v972
    %1042 = vmatpush.msra.mxu0 %v971
    %1043 = vmatpush.msra.mxu0 %v970
    %1044 = vmatpush.msra.mxu0 %v969
    %1045 = vmatpush.msra.mxu0 %v968
    %1046 = vmatpush.msra.mxu0 %v967
    %1047 = vmatpush.msra.mxu0 %v966
    %1048 = vmatmul.f32.gmra.mxu0 %v990
    %v1049 = vpop.f32.mrf.mxu0
    %v1050 = vadd.f32 %v1030, %v1049
    %1051 = vdwg.mxu0
    %vm1052 = vcmask 254976
    %1053 = vst.msk [vmem:[#allocation10] sm:$0x3] %vm1052, %v1050
    // Predicated region
    $region38: #{tpu_custom_call.1} parent=1 // pred_check
      _
    $region39: #{tpu_custom_call.1} parent=1 // pred_check_branch
      %1055 = sbr.rel (0) target = $region41
    $region40: #{tpu_custom_call.1} parent=1 // pred_region
      %1057 = vsyncadd [#allocation8], 0
      %s1059 = sshll.u32 [#allocation10], 4
      %s1060 = int_to_ptr.vmem [resolvable:$true] %s1059
      %s1061 = sshll.u32 %s8, 4
      %s1062 = int_to_ptr.hbm [resolvable:$true] %s1061
      %1064 = dma.vmem_to_hbm [thread:$0]  %s1060, 32, %s1062, [#allocation8]
    $region41: #{tpu_custom_call.1} parent=1 // pred_fallthru
      _
    // Predicated region
    $region42: #{tpu_custom_call.1} parent=1 // pred_check
      _
    $region43: #{tpu_custom_call.1} parent=1 // pred_check_branch
      %1066 = sbr.rel (0) target = $region45
    $region44: #{tpu_custom_call.1} parent=1 // pred_region
      %1068 = dma.done [#allocation8], 32
    $region45: #{tpu_custom_call.1} parent=1 // pred_fallthru
      _
    %1069 = vsyncpa [#allocation8], 1
    %1070 = vsyncpa [#allocation9], 1

</llo_original>
